<compile_context>
chip_gen: v5e
topology: v5e:2x2
jax: 0.10.0
libtpu: 0.0.40
codegen_flags: <defaults>
</compile_context>

<pallas_src>
import functools

import numpy as np
import jax
import jax.numpy as jnp
from jax import lax
from jax.experimental import pallas as pl
from jax.experimental.pallas import tpu as pltpu


def _round_up(x, m):
    return ((x + m - 1) // m) * m


def _cdiv(a, b):
    return -(-a // b)


def _embed_kernel(z_ref, table_ref, out_ref, *, sub, precision):
    # z_ref:     (TM, pack)  int32   -- row index into table_ref, block offsets pre-added
    # table_ref: (K, LANE)   f32/bf16 block-diagonal replicated table
    # out_ref:   (TM, LANE)  out dtype; one row carries `pack` atom embeddings
    table = table_ref[...]
    k_dim = table.shape[0]
    pack = z_ref.shape[1]
    tm = out_ref.shape[0]

    def chunk(r0, size):
        z = z_ref[pl.ds(r0, size), :]                                   # (size, pack)
        cols = lax.broadcasted_iota(jnp.int32, (size, k_dim), 1)
        onehot = jnp.zeros((size, k_dim), table.dtype)
        for p in range(pack):                                           # static, small
            onehot = onehot + (cols == z[:, p:p + 1]).astype(table.dtype)
        out_ref[pl.ds(r0, size), :] = jnp.dot(
            onehot, table,
            preferred_element_type=jnp.float32,
            precision=precision,
        ).astype(out_ref.dtype)

    # Strip-mine the compute so the (size, K) one-hot temp stays ~1 MiB even at
    # large DMA tiles (bounds live ranges -> no spills).
    n_full, rem = divmod(tm, sub)
    if n_full > 0:
        def body(s, carry):
            chunk(pl.multiple_of(s * sub, sub), sub)
            return carry
        lax.fori_loop(0, n_full, body, 0, unroll=True)
    if rem:
        chunk(n_full * sub, rem)


def atom_embedding(Z, table, *, tile_rows=4096, sub_rows=512, out_dtype=None):
    """Pallas equivalent of AtomEmbedding.forward.

    Z:     (nAtoms,) integer atom types in [0, num_elements].
    table: (num_elements + 1, emb_size) embedding weights.
    Returns (nAtoms, emb_size) array of `out_dtype` (default: table.dtype).
    """
    n_atoms = Z.shape[0]
    num_rows, emb_size = table.shape
    out_dtype = table.dtype if out_dtype is None else np.dtype(out_dtype)

    # ---- output packing: keep the stored last dim a dense multiple of 128 ----
    if emb_size % 128 == 0:
        pack, lane = 1, emb_size                       # direct lane-dense write
    elif 128 % emb_size == 0:
        pack, lane = 128 // emb_size, 128              # pack several atoms per row
    else:
        pack, lane = 1, _round_up(emb_size, 128)       # fallback: pad + trim columns
        # TODO(synk): odd emb_size pays lane padding; pick emb_size | 128 in production.

    r_pad = _round_up(num_rows, 128)                   # dense MXU contraction per block
    k_dim = pack * r_pad

    # bf16 output -> bf16 table + one-hot (single-pass MXU, half HBM traffic).
    # f32 path pins HIGHEST so 0/1 selection of f32 rows is bit-exact.
    if out_dtype == np.dtype(jnp.bfloat16):
        kern_dtype, precision = jnp.bfloat16, jax.lax.Precision.DEFAULT
    else:
        kern_dtype, precision = table.dtype, jax.lax.Precision.HIGHEST

    # ---- tiling over packed output rows ----
    rows = _cdiv(n_atoms, pack)                        # rows holding real atoms
    rows_pad = _round_up(rows, 8)                      # <=7 padded rows total

    tile_rows = _round_up(max(tile_rows, 8), 8)
    tile_rows = min(tile_rows, rows_pad)
    if rows_pad >= 2 * 1024:                           # enough work: keep grid >= 2 so
        tile_rows = min(tile_rows, _round_up(_cdiv(rows_pad, 2), 8))  # v7x megacore can shard
    grid_rows = _cdiv(rows_pad, tile_rows)

    # One-hot strip size: ~1 MiB temp, multiple of 8, <= tile_rows.
    itemsize = np.dtype(kern_dtype).itemsize
    sub = min(_round_up(max(sub_rows, 8), 8),
              max(8, ((1 << 20) // (k_dim * itemsize)) // 8 * 8),
              tile_rows)

    # ---- inputs ----
    # Z padded so input reads never run past the array; invalid indices
    # (torch.nn.Embedding would raise) are mapped to element 0 so they can never
    # corrupt a neighbouring packed atom.
    n_atoms_in = grid_rows * tile_rows * pack
    z = Z.astype(jnp.int32)
    z = jnp.where((z >= 0) & (z < num_rows), z, 0)
    z = jnp.pad(z, (0, n_atoms_in - n_atoms)).reshape(grid_rows * tile_rows, pack)
    z = z + (jnp.arange(pack, dtype=jnp.int32) * r_pad)[None, :]   # block-diag offsets

    # Block-diagonal replicated table: block p holds the table in rows
    # [p*r_pad : p*r_pad+num_rows] and columns [p*emb : (p+1)*emb].
    tbl = table.astype(kern_dtype)
    blocks = [jnp.pad(tbl, ((0, r_pad - num_rows),
                            (p * emb_size, lane - (p + 1) * emb_size)))
              for p in range(pack)]
    table_bd = blocks[0] if pack == 1 else jnp.concatenate(blocks, axis=0)

    kernel = functools.partial(_embed_kernel, sub=sub, precision=precision)
    out = pl.pallas_call(
        kernel,
        out_shape=jax.ShapeDtypeStruct((rows_pad, lane), out_dtype),
        grid_spec=pltpu.PrefetchScalarGridSpec(
            num_scalar_prefetch=0,
            grid=(grid_rows,),
            in_specs=[
                pl.BlockSpec((tile_rows, pack), lambda i: (i, 0)),    # packed Z tile
                pl.BlockSpec((k_dim, lane), lambda i: (0, 0)),        # full block-diag table
            ],
            out_specs=pl.BlockSpec((tile_rows, lane), lambda i: (i, 0)),
        ),
        compiler_params=pltpu.CompilerParams(
            dimension_semantics=("parallel",),        # megacore-shardable grid axis
        ),
    )(z, table_bd)

    # Unpack back to (nAtoms, emb_size). The reshape is layout plumbing; only up
    # to (8*pack - 1) padded atom rows are trimmed.
    if pack > 1:
        h = out.reshape(rows_pad * pack, emb_size)
    elif lane != emb_size:
        h = out[:, :emb_size]
    else:
        h = out
    if h.shape[0] != n_atoms:
        h = h[:n_atoms]
    return h


if __name__ == "__main__":
    key = jax.random.PRNGKey(0)
    k_w, k_z1, k_z2, k_w3, k_z3 = jax.random.split(key, 5)
    bound = float(np.sqrt(3.0))   # torch.nn.init.uniform_(weight, -sqrt(3), sqrt(3))

    # Case 1: emb_size=32 (< 128) -> packed path, 4 atoms per 128-lane row.
    emb_size, num_elements = 32, 20
    table = jax.random.uniform(k_w, (num_elements + 1, emb_size),
                               minval=-bound, maxval=bound, dtype=jnp.float32)
    n_atoms = 16
    Z = jax.random.randint(k_z1, (n_atoms,), 0, num_elements + 1, dtype=jnp.int32)
    h = atom_embedding(Z, table)
    jax.block_until_ready(h)
    assert h.shape == (n_atoms, emb_size) and h.dtype == jnp.float32
    np.testing.assert_allclose(np.asarray(h), np.asarray(table[Z]), rtol=0, atol=0)

    # Case 2: atom count that is neither a multiple of 8 nor of the packing factor.
    n_atoms2 = 13
    Z2 = jax.random.randint(k_z2, (n_atoms2,), 0, num_elements + 1, dtype=jnp.int32)
    h2 = atom_embedding(Z2, table)
    jax.block_until_ready(h2)
    assert h2.shape == (n_atoms2, emb_size)
    np.testing.assert_allclose(np.asarray(h2), np.asarray(table[Z2]), rtol=0, atol=0)

    # Case 3: bf16 output path (bf16 table + one-hot, single-pass MXU, half HBM).
    h_bf16 = atom_embedding(Z, table, out_dtype=jnp.bfloat16)
    jax.block_until_ready(h_bf16)
    assert h_bf16.dtype == jnp.bfloat16
    np.testing.assert_allclose(
        np.asarray(h_bf16.astype(jnp.float32)),
        np.asarray(table.astype(jnp.bfloat16)[Z].astype(jnp.float32)),
        rtol=0, atol=0)

    # Case 4: emb_size=128 -> direct lane-dense path (no packing, no padding).
    emb_size3, num_elements3, n_atoms3 = 128, 10, 40
    table3 = jax.random.uniform(k_w3, (num_elements3 + 1, emb_size3),
                                minval=-bound, maxval=bound, dtype=jnp.float32)
    Z3 = jax.random.randint(k_z3, (n_atoms3,), 0, num_elements3 + 1, dtype=jnp.int32)
    h3 = atom_embedding(Z3, table3)
    jax.block_until_ready(h3)
    assert h3.shape == (n_atoms3, emb_size3)
    np.testing.assert_allclose(np.asarray(h3), np.asarray(table3[Z3]), rtol=0, atol=0)

    print("KERNEL_OK")
</pallas_src>

<mosaic_0001>
module attributes {stable_mosaic.version = 11 : i64} {
  func.func @_embed_kernel(%arg0: i32, %arg1: memref<8x4xi32, #tpu.memory_space<vmem>>, %arg2: memref<512x128xf32, #tpu.memory_space<vmem>>, %arg3: memref<8x128xf32, #tpu.memory_space<vmem>>) attributes {dimension_semantics = [#tpu.dimension_semantics<parallel>], iteration_bounds = array<i64: 1>, scalar_prefetch = 0 : i64, scratch_operands = 0 : i64, tpu.core_type = #tpu.core_type<tc>, window_params = [{transform_indices = @transform_0, window_bounds = array<i64: 8, 4>}, {pipeline_mode = #tpu.pipeline_mode<synchronous>, transform_indices = @transform_1, window_bounds = array<i64: 512, 128>}, {transform_indices = @transform_2, window_bounds = array<i64: 8, 128>}]} {
    %c0 = arith.constant 0 : index
    %c0_0 = arith.constant 0 : index
    %0 = vector.load %arg2[%c0, %c0_0] : memref<512x128xf32, #tpu.memory_space<vmem>>, vector<512x128xf32>
    %c0_i32 = arith.constant 0 : i32
    %c8_i32 = arith.constant 8 : i32
    %1 = arith.muli %c0_i32, %c8_i32 : i32
    %2 = tpu.assume_multiple %1, 8 : i32
    %3 = arith.index_cast %2 : i32 to index
    %c0_1 = arith.constant 0 : index
    %4 = vector.load %arg1[%3, %c0_1] : memref<8x4xi32, #tpu.memory_space<vmem>>, vector<8x4xi32>
    %5 = tpu.iota {dimensions = array<i32: 1>} : vector<8x512xi32>
    %cst = arith.constant 0.000000e+00 : f32
    %6 = vector.broadcast %cst : f32 to vector<8x512xf32>
    %7 = vector.extract_strided_slice %4 {offsets = [0, 0], sizes = [8, 1], strides = [1, 1]} : vector<8x4xi32> to vector<8x1xi32>
    %8 = vector.broadcast %7 : vector<8x1xi32> to vector<8x512xi32>
    %9 = arith.cmpi eq, %5, %8 : vector<8x512xi32>
    %10 = arith.extui %9 : vector<8x512xi1> to vector<8x512xi32>
    %11 = arith.sitofp %10 : vector<8x512xi32> to vector<8x512xf32>
    %12 = arith.addf %6, %11 : vector<8x512xf32>
    %13 = vector.extract_strided_slice %4 {offsets = [0, 1], sizes = [8, 1], strides = [1, 1]} : vector<8x4xi32> to vector<8x1xi32>
    %14 = vector.broadcast %13 : vector<8x1xi32> to vector<8x512xi32>
    %15 = arith.cmpi eq, %5, %14 : vector<8x512xi32>
    %16 = arith.extui %15 : vector<8x512xi1> to vector<8x512xi32>
    %17 = arith.sitofp %16 : vector<8x512xi32> to vector<8x512xf32>
    %18 = arith.addf %12, %17 : vector<8x512xf32>
    %19 = vector.extract_strided_slice %4 {offsets = [0, 2], sizes = [8, 1], strides = [1, 1]} : vector<8x4xi32> to vector<8x1xi32>
    %20 = vector.broadcast %19 : vector<8x1xi32> to vector<8x512xi32>
    %21 = arith.cmpi eq, %5, %20 : vector<8x512xi32>
    %22 = arith.extui %21 : vector<8x512xi1> to vector<8x512xi32>
    %23 = arith.sitofp %22 : vector<8x512xi32> to vector<8x512xf32>
    %24 = arith.addf %18, %23 : vector<8x512xf32>
    %25 = vector.extract_strided_slice %4 {offsets = [0, 3], sizes = [8, 1], strides = [1, 1]} : vector<8x4xi32> to vector<8x1xi32>
    %26 = vector.broadcast %25 : vector<8x1xi32> to vector<8x512xi32>
    %27 = arith.cmpi eq, %5, %26 : vector<8x512xi32>
    %28 = arith.extui %27 : vector<8x512xi1> to vector<8x512xi32>
    %29 = arith.sitofp %28 : vector<8x512xi32> to vector<8x512xf32>
    %30 = arith.addf %24, %29 : vector<8x512xf32>
    %cst_2 = arith.constant dense<0.000000e+00> : vector<8x128xf32>
    %31 = tpu.matmul %30, %0, %cst_2 {dimension_numbers = #tpu.dot_dimension_numbers<[1], [0], [0], [1], [0, 0, 1, 1], [], []>, precision = #tpu.contract_precision<fp32>} : vector<8x512xf32>, vector<512x128xf32>, vector<8x128xf32> -> vector<8x128xf32>
    %32 = arith.index_cast %2 : i32 to index
    %c0_3 = arith.constant 0 : index
    %33 = vector.load %arg3[%32, %c0_3] : memref<8x128xf32, #tpu.memory_space<vmem>>, vector<8x128xf32>
    tpu.vector_store %arg3[%32, %c0_3], %31 {strides = array<i32>} : memref<8x128xf32, #tpu.memory_space<vmem>>, vector<8x128xf32>,
    %c1_i32 = arith.constant 1 : i32
    return
  }
  func.func @transform_0(%arg0: i32) -> (i32, i32) {
    %c0_i32 = arith.constant 0 : i32
    %c0_i32_0 = arith.constant 0 : i32
    return %arg0, %c0_i32 : i32, i32
  }
  func.func @transform_1(%arg0: i32) -> (i32, i32) {
    %c0_i32 = arith.constant 0 : i32
    %c0_i32_0 = arith.constant 0 : i32
    %c0_i32_1 = arith.constant 0 : i32
    return %c0_i32, %c0_i32_0 : i32, i32
  }
  func.func @transform_2(%arg0: i32) -> (i32, i32) {
    %c0_i32 = arith.constant 0 : i32
    %c0_i32_0 = arith.constant 0 : i32
    return %arg0, %c0_i32 : i32, i32
  }
}

</mosaic_0001>

<llo_original>
// kernel: tpu_custom_call.1
$region0: #{tpu_custom_call.1}
  #allocation0 [shape = 'u32[]', space=smem, size = 0x4, offset = 0x4, fixed_abs, tag = 'smem constant byte address 0x4 - core index']
  #allocation1 [shape = 'u32[72,128]{1,0:T(1,128)}', space=vmem, size = 0x9000, scoped, tag = 'internal scratch']
  %s0 = inlined_call_operand.vmem [shape: s32[8,4], index: 0, kind: input, shape index: {}]
  %s1 = inlined_call_operand.hbm [shape: f32[512,128], index: 1, kind: input, shape index: {}]
  %s2 = inlined_call_operand.hbm [shape: f32[8,128], index: 2, kind: output, shape index: {}]
  %s3 = sld [smem:[#allocation0]]
  $region22: #{tpu_custom_call.1} parent=0
    _
  %s5 = ssub.s32 1, %s3
  %s6 = scalar_select 0, %s5, %s3
  $region1: #{tpu_custom_call.1} parent=0
    #allocation2 [shape = 'u8[262144]{0}', space=vmem, size = 0x40000, scoped, tag = 'input window, operand 1, single buffered']
    #allocation3 [shape = 's32[1]{0}', space=sflag, size = 0x4, scoped, tag = 'scoped memory for tpu_custom_call.1']
    #allocation4 [shape = 's32[1]{0}', space=sflag, size = 0x4, scoped, tag = 'scoped memory for tpu_custom_call.1']
    #allocation5 [shape = 'u8[4096]{0}', space=vmem, size = 0x1000, scoped, tag = 'output window, operand 0, single buffered']
    %7 = vsyncpa [#allocation3], 0
    %8 = vsyncpa [#allocation4], 0
    // Predicated region
    $region2: #{tpu_custom_call.1} parent=1 // pred_check
      _
    $region3: #{tpu_custom_call.1} parent=1 // pred_check_branch
      %10 = sbr.rel (0) target = $region5
    $region4: #{tpu_custom_call.1} parent=1 // pred_region
      _
    $region5: #{tpu_custom_call.1} parent=1 // pred_fallthru
      _
    // Predicated region
    $region6: #{tpu_custom_call.1} parent=1 // pred_check
      _
    $region7: #{tpu_custom_call.1} parent=1 // pred_check_branch
      %12 = sbr.rel (0) target = $region9
    $region8: #{tpu_custom_call.1} parent=1 // pred_region
      %14 = vsyncadd [#allocation3], 0
      %s15 = sshll.u32 %s1, 4
      %s16 = int_to_ptr.hbm [resolvable:$true] %s15
      %s17 = sshll.u32 [#allocation2], 4
      %s18 = int_to_ptr.vmem [resolvable:$true] %s17
      %23 = dma.hbm_to_vmem [thread:$0]  %s16, 8192, %s18, [#allocation3], 128, 128, 8
    $region9: #{tpu_custom_call.1} parent=1 // pred_fallthru
      _
    // Predicated region
    $region10: #{tpu_custom_call.1} parent=1 // pred_check
      _
    $region11: #{tpu_custom_call.1} parent=1 // pred_check_branch
      %25 = sbr.rel (0) target = $region13
    $region12: #{tpu_custom_call.1} parent=1 // pred_region
      %27 = dma.done [#allocation3], 8192
    $region13: #{tpu_custom_call.1} parent=1 // pred_fallthru
      _
    %v28 = vld [vmem:[#allocation2] sm:$0xff]
    %v29 = vld [vmem:[#allocation2 + $0x8] sm:$0xff]
    %v30 = vld [vmem:[#allocation2 + $0x10] sm:$0xff]
    %v31 = vld [vmem:[#allocation2 + $0x18] sm:$0xff]
    %v32 = vld [vmem:[#allocation2 + $0x20] sm:$0xff]
    %v33 = vld [vmem:[#allocation2 + $0x28] sm:$0xff]
    %v34 = vld [vmem:[#allocation2 + $0x30] sm:$0xff]
    %v35 = vld [vmem:[#allocation2 + $0x38] sm:$0xff]
    %v36 = vld [vmem:[#allocation2 + $0x40] sm:$0xff]
    %v37 = vld [vmem:[#allocation2 + $0x48] sm:$0xff]
    %v38 = vld [vmem:[#allocation2 + $0x50] sm:$0xff]
    %v39 = vld [vmem:[#allocation2 + $0x58] sm:$0xff]
    %v40 = vld [vmem:[#allocation2 + $0x60] sm:$0xff]
    %v41 = vld [vmem:[#allocation2 + $0x68] sm:$0xff]
    %v42 = vld [vmem:[#allocation2 + $0x70] sm:$0xff]
    %v43 = vld [vmem:[#allocation2 + $0x78] sm:$0xff]
    %v44 = vld [vmem:[#allocation2 + $0x80] sm:$0xff]
    %v45 = vld [vmem:[#allocation2 + $0x88] sm:$0xff]
    %v46 = vld [vmem:[#allocation2 + $0x90] sm:$0xff]
    %v47 = vld [vmem:[#allocation2 + $0x98] sm:$0xff]
    %v48 = vld [vmem:[#allocation2 + $0xa0] sm:$0xff]
    %v49 = vld [vmem:[#allocation2 + $0xa8] sm:$0xff]
    %v50 = vld [vmem:[#allocation2 + $0xb0] sm:$0xff]
    %v51 = vld [vmem:[#allocation2 + $0xb8] sm:$0xff]
    %v52 = vld [vmem:[#allocation2 + $0xc0] sm:$0xff]
    %v53 = vld [vmem:[#allocation2 + $0xc8] sm:$0xff]
    %v54 = vld [vmem:[#allocation2 + $0xd0] sm:$0xff]
    %v55 = vld [vmem:[#allocation2 + $0xd8] sm:$0xff]
    %v56 = vld [vmem:[#allocation2 + $0xe0] sm:$0xff]
    %v57 = vld [vmem:[#allocation2 + $0xe8] sm:$0xff]
    %v58 = vld [vmem:[#allocation2 + $0xf0] sm:$0xff]
    %v59 = vld [vmem:[#allocation2 + $0xf8] sm:$0xff]
    %v60 = vld [vmem:[#allocation2 + $0x100] sm:$0xff]
    %v61 = vld [vmem:[#allocation2 + $0x108] sm:$0xff]
    %v62 = vld [vmem:[#allocation2 + $0x110] sm:$0xff]
    %v63 = vld [vmem:[#allocation2 + $0x118] sm:$0xff]
    %v64 = vld [vmem:[#allocation2 + $0x120] sm:$0xff]
    %v65 = vld [vmem:[#allocation2 + $0x128] sm:$0xff]
    %v66 = vld [vmem:[#allocation2 + $0x130] sm:$0xff]
    %v67 = vld [vmem:[#allocation2 + $0x138] sm:$0xff]
    %v68 = vld [vmem:[#allocation2 + $0x140] sm:$0xff]
    %v69 = vld [vmem:[#allocation2 + $0x148] sm:$0xff]
    %v70 = vld [vmem:[#allocation2 + $0x150] sm:$0xff]
    %v71 = vld [vmem:[#allocation2 + $0x158] sm:$0xff]
    %v72 = vld [vmem:[#allocation2 + $0x160] sm:$0xff]
    %v73 = vld [vmem:[#allocation2 + $0x168] sm:$0xff]
    %v74 = vld [vmem:[#allocation2 + $0x170] sm:$0xff]
    %v75 = vld [vmem:[#allocation2 + $0x178] sm:$0xff]
    %v76 = vld [vmem:[#allocation2 + $0x180] sm:$0xff]
    %v77 = vld [vmem:[#allocation2 + $0x188] sm:$0xff]
    %v78 = vld [vmem:[#allocation2 + $0x190] sm:$0xff]
    %v79 = vld [vmem:[#allocation2 + $0x198] sm:$0xff]
    %v80 = vld [vmem:[#allocation2 + $0x1a0] sm:$0xff]
    %v81 = vld [vmem:[#allocation2 + $0x1a8] sm:$0xff]
    %v82 = vld [vmem:[#allocation2 + $0x1b0] sm:$0xff]
    %v83 = vld [vmem:[#allocation2 + $0x1b8] sm:$0xff]
    %v84 = vld [vmem:[#allocation2 + $0x1c0] sm:$0xff]
    %v85 = vld [vmem:[#allocation2 + $0x1c8] sm:$0xff]
    %v86 = vld [vmem:[#allocation2 + $0x1d0] sm:$0xff]
    %v87 = vld [vmem:[#allocation2 + $0x1d8] sm:$0xff]
    %v88 = vld [vmem:[#allocation2 + $0x1e0] sm:$0xff]
    %v89 = vld [vmem:[#allocation2 + $0x1e8] sm:$0xff]
    %v90 = vld [vmem:[#allocation2 + $0x1f0] sm:$0xff]
    %v91 = vld [vmem:[#allocation2 + $0x1f8] sm:$0xff]
    %v92 = vld [vmem:[%s0] sm:$0xff]
    %v93 = vlaneseq
    %v94 = vand.u32 %v93, 127
    %v95 = vadd.s32 %v94, 128
    %v96 = vadd.s32 %v94, 256
    %v97 = vadd.s32 %v94, 384
    %98 = vset.pattern.permute.xlu0 0
    %99 = vperm.xlu0 %98, %v92
    %v100 = vpop.permute.xlu0 %99
    %vm101 = vcmp.eq.s32.totalorder %v94, %v100
    %vm102 = vcmp.eq.s32.totalorder %v95, %v100
    %vm103 = vcmp.eq.s32.totalorder %v96, %v100
    %vm104 = vcmp.eq.s32.totalorder %v97, %v100
    %v105 = vsel %vm101, 1, 0
    %v106 = vsel %vm102, 1, 0
    %v107 = vsel %vm103, 1, 0
    %v108 = vsel %vm104, 1, 0
    %v109 = vcvt.s32.f32 %v105
    %v110 = vcvt.s32.f32 %v106
    %v111 = vcvt.s32.f32 %v107
    %v112 = vcvt.s32.f32 %v108
    %v113 = vadd.f32 %v109, 0.0
    %v114 = vadd.f32 %v110, 0.0
    %v115 = vadd.f32 %v111, 0.0
    %v116 = vadd.f32 %v112, 0.0
    %117 = vset.pattern.permute.xlu0 1
    %118 = vperm.xlu0 %117, %v92
    %v119 = vpop.permute.xlu0 %118
    %vm120 = vcmp.eq.s32.totalorder %v94, %v119
    %vm121 = vcmp.eq.s32.totalorder %v95, %v119
    %vm122 = vcmp.eq.s32.totalorder %v96, %v119
    %vm123 = vcmp.eq.s32.totalorder %v97, %v119
    %v124 = vsel %vm120, 1, 0
    %v125 = vsel %vm121, 1, 0
    %v126 = vsel %vm122, 1, 0
    %v127 = vsel %vm123, 1, 0
    %v128 = vcvt.s32.f32 %v124
    %v129 = vcvt.s32.f32 %v125
    %v130 = vcvt.s32.f32 %v126
    %v131 = vcvt.s32.f32 %v127
    %v132 = vadd.f32 %v113, %v128
    %v133 = vadd.f32 %v114, %v129
    %v134 = vadd.f32 %v115, %v130
    %v135 = vadd.f32 %v116, %v131
    %136 = vset.pattern.permute.xlu0 2
    %137 = vperm.xlu0 %136, %v92
    %v138 = vpop.permute.xlu0 %137
    %vm139 = vcmp.eq.s32.totalorder %v94, %v138
    %vm140 = vcmp.eq.s32.totalorder %v95, %v138
    %vm141 = vcmp.eq.s32.totalorder %v96, %v138
    %vm142 = vcmp.eq.s32.totalorder %v97, %v138
    %v143 = vsel %vm139, 1, 0
    %v144 = vsel %vm140, 1, 0
    %v145 = vsel %vm141, 1, 0
    %v146 = vsel %vm142, 1, 0
    %v147 = vcvt.s32.f32 %v143
    %v148 = vcvt.s32.f32 %v144
    %v149 = vcvt.s32.f32 %v145
    %v150 = vcvt.s32.f32 %v146
    %v151 = vadd.f32 %v132, %v147
    %v152 = vadd.f32 %v133, %v148
    %v153 = vadd.f32 %v134, %v149
    %v154 = vadd.f32 %v135, %v150
    %155 = vset.pattern.permute.xlu0 3
    %156 = vperm.xlu0 %155, %v92
    %v157 = vpop.permute.xlu0 %156
    %vm158 = vcmp.eq.s32.totalorder %v94, %v157
    %vm159 = vcmp.eq.s32.totalorder %v95, %v157
    %vm160 = vcmp.eq.s32.totalorder %v96, %v157
    %vm161 = vcmp.eq.s32.totalorder %v97, %v157
    %v162 = vsel %vm158, 1, 0
    %v163 = vsel %vm159, 1, 0
    %v164 = vsel %vm160, 1, 0
    %v165 = vsel %vm161, 1, 0
    %v166 = vcvt.s32.f32 %v162
    %v167 = vcvt.s32.f32 %v163
    %v168 = vcvt.s32.f32 %v164
    %v169 = vcvt.s32.f32 %v165
    %v170 = vadd.f32 %v151, %v166
    %v171 = vadd.f32 %v152, %v167
    %v172 = vadd.f32 %v153, %v168
    %v173 = vadd.f32 %v154, %v169
    %v174 = vand.u32 %v43, 4294901760
    %175 = vmatpush.msra.mxu0 %v174
    %v176 = vand.u32 %v42, 4294901760
    %177 = vmatpush.msra.mxu0 %v176
    %v178 = vand.u32 %v41, 4294901760
    %179 = vmatpush.msra.mxu0 %v178
    %v180 = vand.u32 %v40, 4294901760
    %181 = vmatpush.msra.mxu0 %v180
    %v182 = vand.u32 %v39, 4294901760
    %183 = vmatpush.msra.mxu0 %v182
    %v184 = vand.u32 %v38, 4294901760
    %185 = vmatpush.msra.mxu0 %v184
    %v186 = vand.u32 %v37, 4294901760
    %187 = vmatpush.msra.mxu0 %v186
    %v188 = vand.u32 %v36, 4294901760
    %189 = vmatpush.msra.mxu0 %v188
    %v190 = vand.u32 %v35, 4294901760
    %191 = vmatpush.msra.mxu0 %v190
    %v192 = vand.u32 %v34, 4294901760
    %193 = vmatpush.msra.mxu0 %v192
    %v194 = vand.u32 %v33, 4294901760
    %195 = vmatpush.msra.mxu0 %v194
    %v196 = vand.u32 %v32, 4294901760
    %197 = vmatpush.msra.mxu0 %v196
    %v198 = vand.u32 %v31, 4294901760
    %199 = vmatpush.msra.mxu0 %v198
    %v200 = vand.u32 %v30, 4294901760
    %201 = vmatpush.msra.mxu0 %v200
    %v202 = vand.u32 %v29, 4294901760
    %203 = vmatpush.msra.mxu0 %v202
    %v204 = vand.u32 %v28, 4294901760
    %205 = vmatpush.msra.mxu0 %v204
    %v206 = vand.u32 %v170, 4294901760
    %v207 = vsub.f32 %v170, %v206
    %v208 = vand.u32 %v207, 4294901760
    %v209 = vsub.f32 %v207, %v208
    %v210 = vand.u32 %v209, 4294901760
    %211 = vmatmul.f32.gmra.mxu0 %v210
    %v212 = vpop.f32.mrf.mxu0
    %v213 = vadd.f32 0.0, %v212
    %214 = vdwg.mxu0
    %v215 = vand.u32 %v43, 4294901760
    %v216 = vsub.f32 %v43, %v215
    %v217 = vand.u32 %v216, 4294901760
    %v218 = vsub.f32 %v216, %v217
    %v219 = vand.u32 %v218, 4294901760
    %220 = vmatpush.msra.mxu0 %v219
    %v221 = vand.u32 %v42, 4294901760
    %v222 = vsub.f32 %v42, %v221
    %v223 = vand.u32 %v222, 4294901760
    %v224 = vsub.f32 %v222, %v223
    %v225 = vand.u32 %v224, 4294901760
    %226 = vmatpush.msra.mxu0 %v225
    %v227 = vand.u32 %v41, 4294901760
    %v228 = vsub.f32 %v41, %v227
    %v229 = vand.u32 %v228, 4294901760
    %v230 = vsub.f32 %v228, %v229
    %v231 = vand.u32 %v230, 4294901760
    %232 = vmatpush.msra.mxu0 %v231
    %v233 = vand.u32 %v40, 4294901760
    %v234 = vsub.f32 %v40, %v233
    %v235 = vand.u32 %v234, 4294901760
    %v236 = vsub.f32 %v234, %v235
    %v237 = vand.u32 %v236, 4294901760
    %238 = vmatpush.msra.mxu0 %v237
    %v239 = vand.u32 %v39, 4294901760
    %v240 = vsub.f32 %v39, %v239
    %v241 = vand.u32 %v240, 4294901760
    %v242 = vsub.f32 %v240, %v241
    %v243 = vand.u32 %v242, 4294901760
    %244 = vmatpush.msra.mxu0 %v243
    %v245 = vand.u32 %v38, 4294901760
    %v246 = vsub.f32 %v38, %v245
    %v247 = vand.u32 %v246, 4294901760
    %v248 = vsub.f32 %v246, %v247
    %v249 = vand.u32 %v248, 4294901760
    %250 = vmatpush.msra.mxu0 %v249
    %v251 = vand.u32 %v37, 4294901760
    %v252 = vsub.f32 %v37, %v251
    %v253 = vand.u32 %v252, 4294901760
    %v254 = vsub.f32 %v252, %v253
    %v255 = vand.u32 %v254, 4294901760
    %256 = vmatpush.msra.mxu0 %v255
    %v257 = vand.u32 %v36, 4294901760
    %v258 = vsub.f32 %v36, %v257
    %v259 = vand.u32 %v258, 4294901760
    %v260 = vsub.f32 %v258, %v259
    %v261 = vand.u32 %v260, 4294901760
    %262 = vmatpush.msra.mxu0 %v261
    %v263 = vand.u32 %v35, 4294901760
    %v264 = vsub.f32 %v35, %v263
    %v265 = vand.u32 %v264, 4294901760
    %v266 = vsub.f32 %v264, %v265
    %v267 = vand.u32 %v266, 4294901760
    %268 = vmatpush.msra.mxu0 %v267
    %v269 = vand.u32 %v34, 4294901760
    %v270 = vsub.f32 %v34, %v269
    %v271 = vand.u32 %v270, 4294901760
    %v272 = vsub.f32 %v270, %v271
    %v273 = vand.u32 %v272, 4294901760
    %274 = vmatpush.msra.mxu0 %v273
    %v275 = vand.u32 %v33, 4294901760
    %v276 = vsub.f32 %v33, %v275
    %v277 = vand.u32 %v276, 4294901760
    %v278 = vsub.f32 %v276, %v277
    %v279 = vand.u32 %v278, 4294901760
    %280 = vmatpush.msra.mxu0 %v279
    %v281 = vand.u32 %v32, 4294901760
    %v282 = vsub.f32 %v32, %v281
    %v283 = vand.u32 %v282, 4294901760
    %v284 = vsub.f32 %v282, %v283
    %v285 = vand.u32 %v284, 4294901760
    %286 = vmatpush.msra.mxu0 %v285
    %v287 = vand.u32 %v31, 4294901760
    %v288 = vsub.f32 %v31, %v287
    %v289 = vand.u32 %v288, 4294901760
    %v290 = vsub.f32 %v288, %v289
    %v291 = vand.u32 %v290, 4294901760
    %292 = vmatpush.msra.mxu0 %v291
    %v293 = vand.u32 %v30, 4294901760
    %v294 = vsub.f32 %v30, %v293
    %v295 = vand.u32 %v294, 4294901760
    %v296 = vsub.f32 %v294, %v295
    %v297 = vand.u32 %v296, 4294901760
    %298 = vmatpush.msra.mxu0 %v297
    %v299 = vand.u32 %v29, 4294901760
    %v300 = vsub.f32 %v29, %v299
    %v301 = vand.u32 %v300, 4294901760
    %v302 = vsub.f32 %v300, %v301
    %v303 = vand.u32 %v302, 4294901760
    %304 = vmatpush.msra.mxu0 %v303
    %v305 = vand.u32 %v28, 4294901760
    %v306 = vsub.f32 %v28, %v305
    %v307 = vand.u32 %v306, 4294901760
    %v308 = vsub.f32 %v306, %v307
    %v309 = vand.u32 %v308, 4294901760
    %310 = vmatpush.msra.mxu0 %v309
    %v311 = vand.u32 %v170, 4294901760
    %312 = vmatmul.f32.gmra.mxu0 %v311
    %v313 = vpop.f32.mrf.mxu0
    %v314 = vadd.f32 %v213, %v313
    %315 = vdwg.mxu0
    %v316 = vand.u32 %v43, 4294901760
    %v317 = vsub.f32 %v43, %v316
    %318 = vmatpush.msra.mxu0 %v317
    %v319 = vand.u32 %v42, 4294901760
    %v320 = vsub.f32 %v42, %v319
    %321 = vmatpush.msra.mxu0 %v320
    %v322 = vand.u32 %v41, 4294901760
    %v323 = vsub.f32 %v41, %v322
    %324 = vmatpush.msra.mxu0 %v323
    %v325 = vand.u32 %v40, 4294901760
    %v326 = vsub.f32 %v40, %v325
    %327 = vmatpush.msra.mxu0 %v326
    %v328 = vand.u32 %v39, 4294901760
    %v329 = vsub.f32 %v39, %v328
    %330 = vmatpush.msra.mxu0 %v329
    %v331 = vand.u32 %v38, 4294901760
    %v332 = vsub.f32 %v38, %v331
    %333 = vmatpush.msra.mxu0 %v332
    %v334 = vand.u32 %v37, 4294901760
    %v335 = vsub.f32 %v37, %v334
    %336 = vmatpush.msra.mxu0 %v335
    %v337 = vand.u32 %v36, 4294901760
    %v338 = vsub.f32 %v36, %v337
    %339 = vmatpush.msra.mxu0 %v338
    %v340 = vand.u32 %v35, 4294901760
    %v341 = vsub.f32 %v35, %v340
    %342 = vmatpush.msra.mxu0 %v341
    %v343 = vand.u32 %v34, 4294901760
    %v344 = vsub.f32 %v34, %v343
    %345 = vmatpush.msra.mxu0 %v344
    %v346 = vand.u32 %v33, 4294901760
    %v347 = vsub.f32 %v33, %v346
    %348 = vmatpush.msra.mxu0 %v347
    %v349 = vand.u32 %v32, 4294901760
    %v350 = vsub.f32 %v32, %v349
    %351 = vmatpush.msra.mxu0 %v350
    %v352 = vand.u32 %v31, 4294901760
    %v353 = vsub.f32 %v31, %v352
    %354 = vmatpush.msra.mxu0 %v353
    %v355 = vand.u32 %v30, 4294901760
    %v356 = vsub.f32 %v30, %v355
    %357 = vmatpush.msra.mxu0 %v356
    %v358 = vand.u32 %v29, 4294901760
    %v359 = vsub.f32 %v29, %v358
    %360 = vmatpush.msra.mxu0 %v359
    %v361 = vand.u32 %v28, 4294901760
    %v362 = vsub.f32 %v28, %v361
    %363 = vmatpush.msra.mxu0 %v362
    %v364 = vand.u32 %v170, 4294901760
    %v365 = vsub.f32 %v170, %v364
    %366 = vmatmul.f32.gmra.mxu0 %v365
    %v367 = vpop.f32.mrf.mxu0
    %v368 = vadd.f32 %v314, %v367
    %369 = vdwg.mxu0
    %v370 = vand.u32 %v43, 4294901760
    %371 = vmatpush.msra.mxu0 %v370
    %v372 = vand.u32 %v42, 4294901760
    %373 = vmatpush.msra.mxu0 %v372
    %v374 = vand.u32 %v41, 4294901760
    %375 = vmatpush.msra.mxu0 %v374
    %v376 = vand.u32 %v40, 4294901760
    %377 = vmatpush.msra.mxu0 %v376
    %v378 = vand.u32 %v39, 4294901760
    %379 = vmatpush.msra.mxu0 %v378
    %v380 = vand.u32 %v38, 4294901760
    %381 = vmatpush.msra.mxu0 %v380
    %v382 = vand.u32 %v37, 4294901760
    %383 = vmatpush.msra.mxu0 %v382
    %v384 = vand.u32 %v36, 4294901760
    %385 = vmatpush.msra.mxu0 %v384
    %v386 = vand.u32 %v35, 4294901760
    %387 = vmatpush.msra.mxu0 %v386
    %v388 = vand.u32 %v34, 4294901760
    %389 = vmatpush.msra.mxu0 %v388
    %v390 = vand.u32 %v33, 4294901760
    %391 = vmatpush.msra.mxu0 %v390
    %v392 = vand.u32 %v32, 4294901760
    %393 = vmatpush.msra.mxu0 %v392
    %v394 = vand.u32 %v31, 4294901760
    %395 = vmatpush.msra.mxu0 %v394
    %v396 = vand.u32 %v30, 4294901760
    %397 = vmatpush.msra.mxu0 %v396
    %v398 = vand.u32 %v29, 4294901760
    %399 = vmatpush.msra.mxu0 %v398
    %v400 = vand.u32 %v28, 4294901760
    %401 = vmatpush.msra.mxu0 %v400
    %v402 = vand.u32 %v170, 4294901760
    %v403 = vsub.f32 %v170, %v402
    %v404 = vand.u32 %v403, 4294901760
    %405 = vmatmul.f32.gmra.mxu0 %v404
    %v406 = vpop.f32.mrf.mxu0
    %v407 = vadd.f32 %v368, %v406
    %408 = vdwg.mxu0
    %v409 = vand.u32 %v43, 4294901760
    %v410 = vsub.f32 %v43, %v409
    %v411 = vand.u32 %v410, 4294901760
    %412 = vmatpush.msra.mxu0 %v411
    %v413 = vand.u32 %v42, 4294901760
    %v414 = vsub.f32 %v42, %v413
    %v415 = vand.u32 %v414, 4294901760
    %416 = vmatpush.msra.mxu0 %v415
    %v417 = vand.u32 %v41, 4294901760
    %v418 = vsub.f32 %v41, %v417
    %v419 = vand.u32 %v418, 4294901760
    %420 = vmatpush.msra.mxu0 %v419
    %v421 = vand.u32 %v40, 4294901760
    %v422 = vsub.f32 %v40, %v421
    %v423 = vand.u32 %v422, 4294901760
    %424 = vmatpush.msra.mxu0 %v423
    %v425 = vand.u32 %v39, 4294901760
    %v426 = vsub.f32 %v39, %v425
    %v427 = vand.u32 %v426, 4294901760
    %428 = vmatpush.msra.mxu0 %v427
    %v429 = vand.u32 %v38, 4294901760
    %v430 = vsub.f32 %v38, %v429
    %v431 = vand.u32 %v430, 4294901760
    %432 = vmatpush.msra.mxu0 %v431
    %v433 = vand.u32 %v37, 4294901760
    %v434 = vsub.f32 %v37, %v433
    %v435 = vand.u32 %v434, 4294901760
    %436 = vmatpush.msra.mxu0 %v435
    %v437 = vand.u32 %v36, 4294901760
    %v438 = vsub.f32 %v36, %v437
    %v439 = vand.u32 %v438, 4294901760
    %440 = vmatpush.msra.mxu0 %v439
    %v441 = vand.u32 %v35, 4294901760
    %v442 = vsub.f32 %v35, %v441
    %v443 = vand.u32 %v442, 4294901760
    %444 = vmatpush.msra.mxu0 %v443
    %v445 = vand.u32 %v34, 4294901760
    %v446 = vsub.f32 %v34, %v445
    %v447 = vand.u32 %v446, 4294901760
    %448 = vmatpush.msra.mxu0 %v447
    %v449 = vand.u32 %v33, 4294901760
    %v450 = vsub.f32 %v33, %v449
    %v451 = vand.u32 %v450, 4294901760
    %452 = vmatpush.msra.mxu0 %v451
    %v453 = vand.u32 %v32, 4294901760
    %v454 = vsub.f32 %v32, %v453
    %v455 = vand.u32 %v454, 4294901760
    %456 = vmatpush.msra.mxu0 %v455
    %v457 = vand.u32 %v31, 4294901760
    %v458 = vsub.f32 %v31, %v457
    %v459 = vand.u32 %v458, 4294901760
    %460 = vmatpush.msra.mxu0 %v459
    %v461 = vand.u32 %v30, 4294901760
    %v462 = vsub.f32 %v30, %v461
    %v463 = vand.u32 %v462, 4294901760
    %464 = vmatpush.msra.mxu0 %v463
    %v465 = vand.u32 %v29, 4294901760
    %v466 = vsub.f32 %v29, %v465
    %v467 = vand.u32 %v466, 4294901760
    %468 = vmatpush.msra.mxu0 %v467
    %v469 = vand.u32 %v28, 4294901760
    %v470 = vsub.f32 %v28, %v469
    %v471 = vand.u32 %v470, 4294901760
    %472 = vmatpush.msra.mxu0 %v471
    %v473 = vand.u32 %v170, 4294901760
    %474 = vmatmul.f32.gmra.mxu0 %v473
    %v475 = vpop.f32.mrf.mxu0
    %v476 = vadd.f32 %v407, %v475
    %477 = vdwg.mxu0
    %v478 = vand.u32 %v43, 4294901760
    %479 = vmatpush.msra.mxu0 %v478
    %v480 = vand.u32 %v42, 4294901760
    %481 = vmatpush.msra.mxu0 %v480
    %v482 = vand.u32 %v41, 4294901760
    %483 = vmatpush.msra.mxu0 %v482
    %v484 = vand.u32 %v40, 4294901760
    %485 = vmatpush.msra.mxu0 %v484
    %v486 = vand.u32 %v39, 4294901760
    %487 = vmatpush.msra.mxu0 %v486
    %v488 = vand.u32 %v38, 4294901760
    %489 = vmatpush.msra.mxu0 %v488
    %v490 = vand.u32 %v37, 4294901760
    %491 = vmatpush.msra.mxu0 %v490
    %v492 = vand.u32 %v36, 4294901760
    %493 = vmatpush.msra.mxu0 %v492
    %v494 = vand.u32 %v35, 4294901760
    %495 = vmatpush.msra.mxu0 %v494
    %v496 = vand.u32 %v34, 4294901760
    %497 = vmatpush.msra.mxu0 %v496
    %v498 = vand.u32 %v33, 4294901760
    %499 = vmatpush.msra.mxu0 %v498
    %v500 = vand.u32 %v32, 4294901760
    %501 = vmatpush.msra.mxu0 %v500
    %v502 = vand.u32 %v31, 4294901760
    %503 = vmatpush.msra.mxu0 %v502
    %v504 = vand.u32 %v30, 4294901760
    %505 = vmatpush.msra.mxu0 %v504
    %v506 = vand.u32 %v29, 4294901760
    %507 = vmatpush.msra.mxu0 %v506
    %v508 = vand.u32 %v28, 4294901760
    %509 = vmatpush.msra.mxu0 %v508
    %v510 = vand.u32 %v170, 4294901760
    %511 = vmatmul.f32.gmra.mxu0 %v510
    %v512 = vpop.f32.mrf.mxu0
    %v513 = vadd.f32 %v476, %v512
    %514 = vdwg.mxu0
    %v515 = vand.u32 %v59, 4294901760
    %516 = vmatpush.msra.mxu0 %v515
    %v517 = vand.u32 %v58, 4294901760
    %518 = vmatpush.msra.mxu0 %v517
    %v519 = vand.u32 %v57, 4294901760
    %520 = vmatpush.msra.mxu0 %v519
    %v521 = vand.u32 %v56, 4294901760
    %522 = vmatpush.msra.mxu0 %v521
    %v523 = vand.u32 %v55, 4294901760
    %524 = vmatpush.msra.mxu0 %v523
    %v525 = vand.u32 %v54, 4294901760
    %526 = vmatpush.msra.mxu0 %v525
    %v527 = vand.u32 %v53, 4294901760
    %528 = vmatpush.msra.mxu0 %v527
    %v529 = vand.u32 %v52, 4294901760
    %530 = vmatpush.msra.mxu0 %v529
    %v531 = vand.u32 %v51, 4294901760
    %532 = vmatpush.msra.mxu0 %v531
    %v533 = vand.u32 %v50, 4294901760
    %534 = vmatpush.msra.mxu0 %v533
    %v535 = vand.u32 %v49, 4294901760
    %536 = vmatpush.msra.mxu0 %v535
    %v537 = vand.u32 %v48, 4294901760
    %538 = vmatpush.msra.mxu0 %v537
    %v539 = vand.u32 %v47, 4294901760
    %540 = vmatpush.msra.mxu0 %v539
    %v541 = vand.u32 %v46, 4294901760
    %542 = vmatpush.msra.mxu0 %v541
    %v543 = vand.u32 %v45, 4294901760
    %544 = vmatpush.msra.mxu0 %v543
    %v545 = vand.u32 %v44, 4294901760
    %546 = vmatpush.msra.mxu0 %v545
    %v547 = vand.u32 %v171, 4294901760
    %v548 = vsub.f32 %v171, %v547
    %v549 = vand.u32 %v548, 4294901760
    %v550 = vsub.f32 %v548, %v549
    %v551 = vand.u32 %v550, 4294901760
    %552 = vmatmul.f32.gmra.mxu0 %v551
    %v553 = vpop.f32.mrf.mxu0
    %v554 = vadd.f32 %v513, %v553
    %555 = vdwg.mxu0
    %v556 = vand.u32 %v59, 4294901760
    %v557 = vsub.f32 %v59, %v556
    %v558 = vand.u32 %v557, 4294901760
    %v559 = vsub.f32 %v557, %v558
    %v560 = vand.u32 %v559, 4294901760
    %561 = vmatpush.msra.mxu0 %v560
    %v562 = vand.u32 %v58, 4294901760
    %v563 = vsub.f32 %v58, %v562
    %v564 = vand.u32 %v563, 4294901760
    %v565 = vsub.f32 %v563, %v564
    %v566 = vand.u32 %v565, 4294901760
    %567 = vmatpush.msra.mxu0 %v566
    %v568 = vand.u32 %v57, 4294901760
    %v569 = vsub.f32 %v57, %v568
    %v570 = vand.u32 %v569, 4294901760
    %v571 = vsub.f32 %v569, %v570
    %v572 = vand.u32 %v571, 4294901760
    %573 = vmatpush.msra.mxu0 %v572
    %v574 = vand.u32 %v56, 4294901760
    %v575 = vsub.f32 %v56, %v574
    %v576 = vand.u32 %v575, 4294901760
    %v577 = vsub.f32 %v575, %v576
    %v578 = vand.u32 %v577, 4294901760
    %579 = vmatpush.msra.mxu0 %v578
    %v580 = vand.u32 %v55, 4294901760
    %v581 = vsub.f32 %v55, %v580
    %v582 = vand.u32 %v581, 4294901760
    %v583 = vsub.f32 %v581, %v582
    %v584 = vand.u32 %v583, 4294901760
    %585 = vmatpush.msra.mxu0 %v584
    %v586 = vand.u32 %v54, 4294901760
    %v587 = vsub.f32 %v54, %v586
    %v588 = vand.u32 %v587, 4294901760
    %v589 = vsub.f32 %v587, %v588
    %v590 = vand.u32 %v589, 4294901760
    %591 = vmatpush.msra.mxu0 %v590
    %v592 = vand.u32 %v53, 4294901760
    %v593 = vsub.f32 %v53, %v592
    %v594 = vand.u32 %v593, 4294901760
    %v595 = vsub.f32 %v593, %v594
    %v596 = vand.u32 %v595, 4294901760
    %597 = vmatpush.msra.mxu0 %v596
    %v598 = vand.u32 %v52, 4294901760
    %v599 = vsub.f32 %v52, %v598
    %v600 = vand.u32 %v599, 4294901760
    %v601 = vsub.f32 %v599, %v600
    %v602 = vand.u32 %v601, 4294901760
    %603 = vmatpush.msra.mxu0 %v602
    %v604 = vand.u32 %v51, 4294901760
    %v605 = vsub.f32 %v51, %v604
    %v606 = vand.u32 %v605, 4294901760
    %v607 = vsub.f32 %v605, %v606
    %v608 = vand.u32 %v607, 4294901760
    %609 = vmatpush.msra.mxu0 %v608
    %v610 = vand.u32 %v50, 4294901760
    %v611 = vsub.f32 %v50, %v610
    %v612 = vand.u32 %v611, 4294901760
    %v613 = vsub.f32 %v611, %v612
    %v614 = vand.u32 %v613, 4294901760
    %615 = vmatpush.msra.mxu0 %v614
    %v616 = vand.u32 %v49, 4294901760
    %v617 = vsub.f32 %v49, %v616
    %v618 = vand.u32 %v617, 4294901760
    %v619 = vsub.f32 %v617, %v618
    %v620 = vand.u32 %v619, 4294901760
    %621 = vmatpush.msra.mxu0 %v620
    %v622 = vand.u32 %v48, 4294901760
    %v623 = vsub.f32 %v48, %v622
    %v624 = vand.u32 %v623, 4294901760
    %v625 = vsub.f32 %v623, %v624
    %v626 = vand.u32 %v625, 4294901760
    %627 = vmatpush.msra.mxu0 %v626
    %v628 = vand.u32 %v47, 4294901760
    %v629 = vsub.f32 %v47, %v628
    %v630 = vand.u32 %v629, 4294901760
    %v631 = vsub.f32 %v629, %v630
    %v632 = vand.u32 %v631, 4294901760
    %633 = vmatpush.msra.mxu0 %v632
    %v634 = vand.u32 %v46, 4294901760
    %v635 = vsub.f32 %v46, %v634
    %v636 = vand.u32 %v635, 4294901760
    %v637 = vsub.f32 %v635, %v636
    %v638 = vand.u32 %v637, 4294901760
    %639 = vmatpush.msra.mxu0 %v638
    %v640 = vand.u32 %v45, 4294901760
    %v641 = vsub.f32 %v45, %v640
    %v642 = vand.u32 %v641, 4294901760
    %v643 = vsub.f32 %v641, %v642
    %v644 = vand.u32 %v643, 4294901760
    %645 = vmatpush.msra.mxu0 %v644
    %v646 = vand.u32 %v44, 4294901760
    %v647 = vsub.f32 %v44, %v646
    %v648 = vand.u32 %v647, 4294901760
    %v649 = vsub.f32 %v647, %v648
    %v650 = vand.u32 %v649, 4294901760
    %651 = vmatpush.msra.mxu0 %v650
    %v652 = vand.u32 %v171, 4294901760
    %653 = vmatmul.f32.gmra.mxu0 %v652
    %v654 = vpop.f32.mrf.mxu0
    %v655 = vadd.f32 %v554, %v654
    %656 = vdwg.mxu0
    %v657 = vand.u32 %v59, 4294901760
    %v658 = vsub.f32 %v59, %v657
    %659 = vmatpush.msra.mxu0 %v658
    %v660 = vand.u32 %v58, 4294901760
    %v661 = vsub.f32 %v58, %v660
    %662 = vmatpush.msra.mxu0 %v661
    %v663 = vand.u32 %v57, 4294901760
    %v664 = vsub.f32 %v57, %v663
    %665 = vmatpush.msra.mxu0 %v664
    %v666 = vand.u32 %v56, 4294901760
    %v667 = vsub.f32 %v56, %v666
    %668 = vmatpush.msra.mxu0 %v667
    %v669 = vand.u32 %v55, 4294901760
    %v670 = vsub.f32 %v55, %v669
    %671 = vmatpush.msra.mxu0 %v670
    %v672 = vand.u32 %v54, 4294901760
    %v673 = vsub.f32 %v54, %v672
    %674 = vmatpush.msra.mxu0 %v673
    %v675 = vand.u32 %v53, 4294901760
    %v676 = vsub.f32 %v53, %v675
    %677 = vmatpush.msra.mxu0 %v676
    %v678 = vand.u32 %v52, 4294901760
    %v679 = vsub.f32 %v52, %v678
    %680 = vmatpush.msra.mxu0 %v679
    %v681 = vand.u32 %v51, 4294901760
    %v682 = vsub.f32 %v51, %v681
    %683 = vmatpush.msra.mxu0 %v682
    %v684 = vand.u32 %v50, 4294901760
    %v685 = vsub.f32 %v50, %v684
    %686 = vmatpush.msra.mxu0 %v685
    %v687 = vand.u32 %v49, 4294901760
    %v688 = vsub.f32 %v49, %v687
    %689 = vmatpush.msra.mxu0 %v688
    %v690 = vand.u32 %v48, 4294901760
    %v691 = vsub.f32 %v48, %v690
    %692 = vmatpush.msra.mxu0 %v691
    %v693 = vand.u32 %v47, 4294901760
    %v694 = vsub.f32 %v47, %v693
    %695 = vmatpush.msra.mxu0 %v694
    %v696 = vand.u32 %v46, 4294901760
    %v697 = vsub.f32 %v46, %v696
    %698 = vmatpush.msra.mxu0 %v697
    %v699 = vand.u32 %v45, 4294901760
    %v700 = vsub.f32 %v45, %v699
    %701 = vmatpush.msra.mxu0 %v700
    %v702 = vand.u32 %v44, 4294901760
    %v703 = vsub.f32 %v44, %v702
    %704 = vmatpush.msra.mxu0 %v703
    %v705 = vand.u32 %v171, 4294901760
    %v706 = vsub.f32 %v171, %v705
    %707 = vmatmul.f32.gmra.mxu0 %v706
    %v708 = vpop.f32.mrf.mxu0
    %v709 = vadd.f32 %v655, %v708
    %710 = vdwg.mxu0
    %v711 = vand.u32 %v59, 4294901760
    %712 = vmatpush.msra.mxu0 %v711
    %v713 = vand.u32 %v58, 4294901760
    %714 = vmatpush.msra.mxu0 %v713
    %v715 = vand.u32 %v57, 4294901760
    %716 = vmatpush.msra.mxu0 %v715
    %v717 = vand.u32 %v56, 4294901760
    %718 = vmatpush.msra.mxu0 %v717
    %v719 = vand.u32 %v55, 4294901760
    %720 = vmatpush.msra.mxu0 %v719
    %v721 = vand.u32 %v54, 4294901760
    %722 = vmatpush.msra.mxu0 %v721
    %v723 = vand.u32 %v53, 4294901760
    %724 = vmatpush.msra.mxu0 %v723
    %v725 = vand.u32 %v52, 4294901760
    %726 = vmatpush.msra.mxu0 %v725
    %v727 = vand.u32 %v51, 4294901760
    %728 = vmatpush.msra.mxu0 %v727
    %v729 = vand.u32 %v50, 4294901760
    %730 = vmatpush.msra.mxu0 %v729
    %v731 = vand.u32 %v49, 4294901760
    %732 = vmatpush.msra.mxu0 %v731
    %v733 = vand.u32 %v48, 4294901760
    %734 = vmatpush.msra.mxu0 %v733
    %v735 = vand.u32 %v47, 4294901760
    %736 = vmatpush.msra.mxu0 %v735
    %v737 = vand.u32 %v46, 4294901760
    %738 = vmatpush.msra.mxu0 %v737
    %v739 = vand.u32 %v45, 4294901760
    %740 = vmatpush.msra.mxu0 %v739
    %v741 = vand.u32 %v44, 4294901760
    %742 = vmatpush.msra.mxu0 %v741
    %v743 = vand.u32 %v171, 4294901760
    %v744 = vsub.f32 %v171, %v743
    %v745 = vand.u32 %v744, 4294901760
    %746 = vmatmul.f32.gmra.mxu0 %v745
    %v747 = vpop.f32.mrf.mxu0
    %v748 = vadd.f32 %v709, %v747
    %749 = vdwg.mxu0
    %v750 = vand.u32 %v59, 4294901760
    %v751 = vsub.f32 %v59, %v750
    %v752 = vand.u32 %v751, 4294901760
    %753 = vmatpush.msra.mxu0 %v752
    %v754 = vand.u32 %v58, 4294901760
    %v755 = vsub.f32 %v58, %v754
    %v756 = vand.u32 %v755, 4294901760
    %757 = vmatpush.msra.mxu0 %v756
    %v758 = vand.u32 %v57, 4294901760
    %v759 = vsub.f32 %v57, %v758
    %v760 = vand.u32 %v759, 4294901760
    %761 = vmatpush.msra.mxu0 %v760
    %v762 = vand.u32 %v56, 4294901760
    %v763 = vsub.f32 %v56, %v762
    %v764 = vand.u32 %v763, 4294901760
    %765 = vmatpush.msra.mxu0 %v764
    %v766 = vand.u32 %v55, 4294901760
    %v767 = vsub.f32 %v55, %v766
    %v768 = vand.u32 %v767, 4294901760
    %769 = vmatpush.msra.mxu0 %v768
    %v770 = vand.u32 %v54, 4294901760
    %v771 = vsub.f32 %v54, %v770
    %v772 = vand.u32 %v771, 4294901760
    %773 = vmatpush.msra.mxu0 %v772
    %v774 = vand.u32 %v53, 4294901760
    %v775 = vsub.f32 %v53, %v774
    %v776 = vand.u32 %v775, 4294901760
    %777 = vmatpush.msra.mxu0 %v776
    %v778 = vand.u32 %v52, 4294901760
    %v779 = vsub.f32 %v52, %v778
    %v780 = vand.u32 %v779, 4294901760
    %781 = vmatpush.msra.mxu0 %v780
    %v782 = vand.u32 %v51, 4294901760
    %v783 = vsub.f32 %v51, %v782
    %v784 = vand.u32 %v783, 4294901760
    %785 = vmatpush.msra.mxu0 %v784
    %v786 = vand.u32 %v50, 4294901760
    %v787 = vsub.f32 %v50, %v786
    %v788 = vand.u32 %v787, 4294901760
    %789 = vmatpush.msra.mxu0 %v788
    %v790 = vand.u32 %v49, 4294901760
    %v791 = vsub.f32 %v49, %v790
    %v792 = vand.u32 %v791, 4294901760
    %793 = vmatpush.msra.mxu0 %v792
    %v794 = vand.u32 %v48, 4294901760
    %v795 = vsub.f32 %v48, %v794
    %v796 = vand.u32 %v795, 4294901760
    %797 = vmatpush.msra.mxu0 %v796
    %v798 = vand.u32 %v47, 4294901760
    %v799 = vsub.f32 %v47, %v798
    %v800 = vand.u32 %v799, 4294901760
    %801 = vmatpush.msra.mxu0 %v800
    %v802 = vand.u32 %v46, 4294901760
    %v803 = vsub.f32 %v46, %v802
    %v804 = vand.u32 %v803, 4294901760
    %805 = vmatpush.msra.mxu0 %v804
    %v806 = vand.u32 %v45, 4294901760
    %v807 = vsub.f32 %v45, %v806
    %v808 = vand.u32 %v807, 4294901760
    %809 = vmatpush.msra.mxu0 %v808
    %v810 = vand.u32 %v44, 4294901760
    %v811 = vsub.f32 %v44, %v810
    %v812 = vand.u32 %v811, 4294901760
    %813 = vmatpush.msra.mxu0 %v812
    %v814 = vand.u32 %v171, 4294901760
    %815 = vmatmul.f32.gmra.mxu0 %v814
    %v816 = vpop.f32.mrf.mxu0
    %v817 = vadd.f32 %v748, %v816
    %818 = vdwg.mxu0
    %v819 = vand.u32 %v59, 4294901760
    %820 = vmatpush.msra.mxu0 %v819
    %v821 = vand.u32 %v58, 4294901760
    %822 = vmatpush.msra.mxu0 %v821
    %v823 = vand.u32 %v57, 4294901760
    %824 = vmatpush.msra.mxu0 %v823
    %v825 = vand.u32 %v56, 4294901760
    %826 = vmatpush.msra.mxu0 %v825
    %v827 = vand.u32 %v55, 4294901760
    %828 = vmatpush.msra.mxu0 %v827
    %v829 = vand.u32 %v54, 4294901760
    %830 = vmatpush.msra.mxu0 %v829
    %v831 = vand.u32 %v53, 4294901760
    %832 = vmatpush.msra.mxu0 %v831
    %v833 = vand.u32 %v52, 4294901760
    %834 = vmatpush.msra.mxu0 %v833
    %v835 = vand.u32 %v51, 4294901760
    %836 = vmatpush.msra.mxu0 %v835
    %v837 = vand.u32 %v50, 4294901760
    %838 = vmatpush.msra.mxu0 %v837
    %v839 = vand.u32 %v49, 4294901760
    %840 = vmatpush.msra.mxu0 %v839
    %v841 = vand.u32 %v48, 4294901760
    %842 = vmatpush.msra.mxu0 %v841
    %v843 = vand.u32 %v47, 4294901760
    %844 = vmatpush.msra.mxu0 %v843
    %v845 = vand.u32 %v46, 4294901760
    %846 = vmatpush.msra.mxu0 %v845
    %v847 = vand.u32 %v45, 4294901760
    %848 = vmatpush.msra.mxu0 %v847
    %v849 = vand.u32 %v44, 4294901760
    %850 = vmatpush.msra.mxu0 %v849
    %v851 = vand.u32 %v171, 4294901760
    %852 = vmatmul.f32.gmra.mxu0 %v851
    %v853 = vpop.f32.mrf.mxu0
    %v854 = vadd.f32 %v817, %v853
    %855 = vdwg.mxu0
    %v856 = vand.u32 %v75, 4294901760
    %857 = vmatpush.msra.mxu0 %v856
    %v858 = vand.u32 %v74, 4294901760
    %859 = vmatpush.msra.mxu0 %v858
    %v860 = vand.u32 %v73, 4294901760
    %861 = vmatpush.msra.mxu0 %v860
    %v862 = vand.u32 %v72, 4294901760
    %863 = vmatpush.msra.mxu0 %v862
    %v864 = vand.u32 %v71, 4294901760
    %865 = vmatpush.msra.mxu0 %v864
    %v866 = vand.u32 %v70, 4294901760
    %867 = vmatpush.msra.mxu0 %v866
    %v868 = vand.u32 %v69, 4294901760
    %869 = vmatpush.msra.mxu0 %v868
    %v870 = vand.u32 %v68, 4294901760
    %871 = vmatpush.msra.mxu0 %v870
    %v872 = vand.u32 %v67, 4294901760
    %873 = vmatpush.msra.mxu0 %v872
    %v874 = vand.u32 %v66, 4294901760
    %875 = vmatpush.msra.mxu0 %v874
    %v876 = vand.u32 %v65, 4294901760
    %877 = vmatpush.msra.mxu0 %v876
    %v878 = vand.u32 %v64, 4294901760
    %879 = vmatpush.msra.mxu0 %v878
    %v880 = vand.u32 %v63, 4294901760
    %881 = vmatpush.msra.mxu0 %v880
    %v882 = vand.u32 %v62, 4294901760
    %883 = vmatpush.msra.mxu0 %v882
    %v884 = vand.u32 %v61, 4294901760
    %885 = vmatpush.msra.mxu0 %v884
    %v886 = vand.u32 %v60, 4294901760
    %887 = vmatpush.msra.mxu0 %v886
    %v888 = vand.u32 %v172, 4294901760
    %v889 = vsub.f32 %v172, %v888
    %v890 = vand.u32 %v889, 4294901760
    %v891 = vsub.f32 %v889, %v890
    %v892 = vand.u32 %v891, 4294901760
    %893 = vmatmul.f32.gmra.mxu0 %v892
    %v894 = vpop.f32.mrf.mxu0
    %v895 = vadd.f32 %v854, %v894
    %896 = vdwg.mxu0
    %v897 = vand.u32 %v75, 4294901760
    %v898 = vsub.f32 %v75, %v897
    %v899 = vand.u32 %v898, 4294901760
    %v900 = vsub.f32 %v898, %v899
    %v901 = vand.u32 %v900, 4294901760
    %902 = vmatpush.msra.mxu0 %v901
    %v903 = vand.u32 %v74, 4294901760
    %v904 = vsub.f32 %v74, %v903
    %v905 = vand.u32 %v904, 4294901760
    %v906 = vsub.f32 %v904, %v905
    %v907 = vand.u32 %v906, 4294901760
    %908 = vmatpush.msra.mxu0 %v907
    %v909 = vand.u32 %v73, 4294901760
    %v910 = vsub.f32 %v73, %v909
    %v911 = vand.u32 %v910, 4294901760
    %v912 = vsub.f32 %v910, %v911
    %v913 = vand.u32 %v912, 4294901760
    %914 = vmatpush.msra.mxu0 %v913
    %v915 = vand.u32 %v72, 4294901760
    %v916 = vsub.f32 %v72, %v915
    %v917 = vand.u32 %v916, 4294901760
    %v918 = vsub.f32 %v916, %v917
    %v919 = vand.u32 %v918, 4294901760
    %920 = vmatpush.msra.mxu0 %v919
    %v921 = vand.u32 %v71, 4294901760
    %v922 = vsub.f32 %v71, %v921
    %v923 = vand.u32 %v922, 4294901760
    %v924 = vsub.f32 %v922, %v923
    %v925 = vand.u32 %v924, 4294901760
    %926 = vmatpush.msra.mxu0 %v925
    %v927 = vand.u32 %v70, 4294901760
    %v928 = vsub.f32 %v70, %v927
    %v929 = vand.u32 %v928, 4294901760
    %v930 = vsub.f32 %v928, %v929
    %v931 = vand.u32 %v930, 4294901760
    %932 = vmatpush.msra.mxu0 %v931
    %v933 = vand.u32 %v69, 4294901760
    %v934 = vsub.f32 %v69, %v933
    %v935 = vand.u32 %v934, 4294901760
    %v936 = vsub.f32 %v934, %v935
    %v937 = vand.u32 %v936, 4294901760
    %938 = vmatpush.msra.mxu0 %v937
    %v939 = vand.u32 %v68, 4294901760
    %v940 = vsub.f32 %v68, %v939
    %v941 = vand.u32 %v940, 4294901760
    %v942 = vsub.f32 %v940, %v941
    %v943 = vand.u32 %v942, 4294901760
    %944 = vmatpush.msra.mxu0 %v943
    %v945 = vand.u32 %v67, 4294901760
    %v946 = vsub.f32 %v67, %v945
    %v947 = vand.u32 %v946, 4294901760
    %v948 = vsub.f32 %v946, %v947
    %v949 = vand.u32 %v948, 4294901760
    %950 = vmatpush.msra.mxu0 %v949
    %v951 = vand.u32 %v66, 4294901760
    %v952 = vsub.f32 %v66, %v951
    %v953 = vand.u32 %v952, 4294901760
    %v954 = vsub.f32 %v952, %v953
    %v955 = vand.u32 %v954, 4294901760
    %956 = vmatpush.msra.mxu0 %v955
    %v957 = vand.u32 %v65, 4294901760
    %v958 = vsub.f32 %v65, %v957
    %v959 = vand.u32 %v958, 4294901760
    %v960 = vsub.f32 %v958, %v959
    %v961 = vand.u32 %v960, 4294901760
    %962 = vmatpush.msra.mxu0 %v961
    %v963 = vand.u32 %v64, 4294901760
    %v964 = vsub.f32 %v64, %v963
    %v965 = vand.u32 %v964, 4294901760
    %v966 = vsub.f32 %v964, %v965
    %v967 = vand.u32 %v966, 4294901760
    %968 = vmatpush.msra.mxu0 %v967
    %v969 = vand.u32 %v63, 4294901760
    %v970 = vsub.f32 %v63, %v969
    %v971 = vand.u32 %v970, 4294901760
    %v972 = vsub.f32 %v970, %v971
    %v973 = vand.u32 %v972, 4294901760
    %974 = vmatpush.msra.mxu0 %v973
    %v975 = vand.u32 %v62, 4294901760
    %v976 = vsub.f32 %v62, %v975
    %v977 = vand.u32 %v976, 4294901760
    %v978 = vsub.f32 %v976, %v977
    %v979 = vand.u32 %v978, 4294901760
    %980 = vmatpush.msra.mxu0 %v979
    %v981 = vand.u32 %v61, 4294901760
    %v982 = vsub.f32 %v61, %v981
    %v983 = vand.u32 %v982, 4294901760
    %v984 = vsub.f32 %v982, %v983
    %v985 = vand.u32 %v984, 4294901760
    %986 = vmatpush.msra.mxu0 %v985
    %v987 = vand.u32 %v60, 4294901760
    %v988 = vsub.f32 %v60, %v987
    %v989 = vand.u32 %v988, 4294901760
    %v990 = vsub.f32 %v988, %v989
    %v991 = vand.u32 %v990, 4294901760
    %992 = vmatpush.msra.mxu0 %v991
    %v993 = vand.u32 %v172, 4294901760
    %994 = vmatmul.f32.gmra.mxu0 %v993
    %v995 = vpop.f32.mrf.mxu0
    %v996 = vadd.f32 %v895, %v995
    %997 = vdwg.mxu0
    %v998 = vand.u32 %v75, 4294901760
    %v999 = vsub.f32 %v75, %v998
    %1000 = vmatpush.msra.mxu0 %v999
    %v1001 = vand.u32 %v74, 4294901760
    %v1002 = vsub.f32 %v74, %v1001
    %1003 = vmatpush.msra.mxu0 %v1002
    %v1004 = vand.u32 %v73, 4294901760
    %v1005 = vsub.f32 %v73, %v1004
    %1006 = vmatpush.msra.mxu0 %v1005
    %v1007 = vand.u32 %v72, 4294901760
    %v1008 = vsub.f32 %v72, %v1007
    %1009 = vmatpush.msra.mxu0 %v1008
    %v1010 = vand.u32 %v71, 4294901760
    %v1011 = vsub.f32 %v71, %v1010
    %1012 = vmatpush.msra.mxu0 %v1011
    %v1013 = vand.u32 %v70, 4294901760
    %v1014 = vsub.f32 %v70, %v1013
    %1015 = vmatpush.msra.mxu0 %v1014
    %v1016 = vand.u32 %v69, 4294901760
    %v1017 = vsub.f32 %v69, %v1016
    %1018 = vmatpush.msra.mxu0 %v1017
    %v1019 = vand.u32 %v68, 4294901760
    %v1020 = vsub.f32 %v68, %v1019
    %1021 = vmatpush.msra.mxu0 %v1020
    %v1022 = vand.u32 %v67, 4294901760
    %v1023 = vsub.f32 %v67, %v1022
    %1024 = vmatpush.msra.mxu0 %v1023
    %v1025 = vand.u32 %v66, 4294901760
    %v1026 = vsub.f32 %v66, %v1025
    %1027 = vmatpush.msra.mxu0 %v1026
    %v1028 = vand.u32 %v65, 4294901760
    %v1029 = vsub.f32 %v65, %v1028
    %1030 = vmatpush.msra.mxu0 %v1029
    %v1031 = vand.u32 %v64, 4294901760
    %v1032 = vsub.f32 %v64, %v1031
    %1033 = vmatpush.msra.mxu0 %v1032
    %v1034 = vand.u32 %v63, 4294901760
    %v1035 = vsub.f32 %v63, %v1034
    %1036 = vmatpush.msra.mxu0 %v1035
    %v1037 = vand.u32 %v62, 4294901760
    %v1038 = vsub.f32 %v62, %v1037
    %1039 = vmatpush.msra.mxu0 %v1038
    %v1040 = vand.u32 %v61, 4294901760
    %v1041 = vsub.f32 %v61, %v1040
    %1042 = vmatpush.msra.mxu0 %v1041
    %v1043 = vand.u32 %v60, 4294901760
    %v1044 = vsub.f32 %v60, %v1043
    %1045 = vmatpush.msra.mxu0 %v1044
    %v1046 = vand.u32 %v172, 4294901760
    %v1047 = vsub.f32 %v172, %v1046
    %1048 = vmatmul.f32.gmra.mxu0 %v1047
    %v1049 = vpop.f32.mrf.mxu0
    %v1050 = vadd.f32 %v996, %v1049
    %1051 = vdwg.mxu0
    %v1052 = vand.u32 %v75, 4294901760
    %1053 = vmatpush.msra.mxu0 %v1052
    %v1054 = vand.u32 %v74, 4294901760
    %1055 = vmatpush.msra.mxu0 %v1054
    %v1056 = vand.u32 %v73, 4294901760
    %1057 = vmatpush.msra.mxu0 %v1056
    %v1058 = vand.u32 %v72, 4294901760
    %1059 = vmatpush.msra.mxu0 %v1058
    %v1060 = vand.u32 %v71, 4294901760
    %1061 = vmatpush.msra.mxu0 %v1060
    %v1062 = vand.u32 %v70, 4294901760
    %1063 = vmatpush.msra.mxu0 %v1062
    %v1064 = vand.u32 %v69, 4294901760
    %1065 = vmatpush.msra.mxu0 %v1064
    %v1066 = vand.u32 %v68, 4294901760
    %1067 = vmatpush.msra.mxu0 %v1066
    %v1068 = vand.u32 %v67, 4294901760
    %1069 = vmatpush.msra.mxu0 %v1068
    %v1070 = vand.u32 %v66, 4294901760
    %1071 = vmatpush.msra.mxu0 %v1070
    %v1072 = vand.u32 %v65, 4294901760
    %1073 = vmatpush.msra.mxu0 %v1072
    %v1074 = vand.u32 %v64, 4294901760
    %1075 = vmatpush.msra.mxu0 %v1074
    %v1076 = vand.u32 %v63, 4294901760
    %1077 = vmatpush.msra.mxu0 %v1076
    %v1078 = vand.u32 %v62, 4294901760
    %1079 = vmatpush.msra.mxu0 %v1078
    %v1080 = vand.u32 %v61, 4294901760
    %1081 = vmatpush.msra.mxu0 %v1080
    %v1082 = vand.u32 %v60, 4294901760
    %1083 = vmatpush.msra.mxu0 %v1082
    %v1084 = vand.u32 %v172, 4294901760
    %v1085 = vsub.f32 %v172, %v1084
    %v1086 = vand.u32 %v1085, 4294901760
    %1087 = vmatmul.f32.gmra.mxu0 %v1086
    %v1088 = vpop.f32.mrf.mxu0
    %v1089 = vadd.f32 %v1050, %v1088
    %1090 = vdwg.mxu0
    %v1091 = vand.u32 %v75, 4294901760
    %v1092 = vsub.f32 %v75, %v1091
    %v1093 = vand.u32 %v1092, 4294901760
    %1094 = vmatpush.msra.mxu0 %v1093
    %v1095 = vand.u32 %v74, 4294901760
    %v1096 = vsub.f32 %v74, %v1095
    %v1097 = vand.u32 %v1096, 4294901760
    %1098 = vmatpush.msra.mxu0 %v1097
    %v1099 = vand.u32 %v73, 4294901760
    %v1100 = vsub.f32 %v73, %v1099
    %v1101 = vand.u32 %v1100, 4294901760
    %1102 = vmatpush.msra.mxu0 %v1101
    %v1103 = vand.u32 %v72, 4294901760
    %v1104 = vsub.f32 %v72, %v1103
    %v1105 = vand.u32 %v1104, 4294901760
    %1106 = vmatpush.msra.mxu0 %v1105
    %v1107 = vand.u32 %v71, 4294901760
    %v1108 = vsub.f32 %v71, %v1107
    %v1109 = vand.u32 %v1108, 4294901760
    %1110 = vmatpush.msra.mxu0 %v1109
    %v1111 = vand.u32 %v70, 4294901760
    %v1112 = vsub.f32 %v70, %v1111
    %v1113 = vand.u32 %v1112, 4294901760
    %1114 = vmatpush.msra.mxu0 %v1113
    %v1115 = vand.u32 %v69, 4294901760
    %v1116 = vsub.f32 %v69, %v1115
    %v1117 = vand.u32 %v1116, 4294901760
    %1118 = vmatpush.msra.mxu0 %v1117
    %v1119 = vand.u32 %v68, 4294901760
    %v1120 = vsub.f32 %v68, %v1119
    %v1121 = vand.u32 %v1120, 4294901760
    %1122 = vmatpush.msra.mxu0 %v1121
    %v1123 = vand.u32 %v67, 4294901760
    %v1124 = vsub.f32 %v67, %v1123
    %v1125 = vand.u32 %v1124, 4294901760
    %1126 = vmatpush.msra.mxu0 %v1125
    %v1127 = vand.u32 %v66, 4294901760
    %v1128 = vsub.f32 %v66, %v1127
    %v1129 = vand.u32 %v1128, 4294901760
    %1130 = vmatpush.msra.mxu0 %v1129
    %v1131 = vand.u32 %v65, 4294901760
    %v1132 = vsub.f32 %v65, %v1131
    %v1133 = vand.u32 %v1132, 4294901760
    %1134 = vmatpush.msra.mxu0 %v1133
    %v1135 = vand.u32 %v64, 4294901760
    %v1136 = vsub.f32 %v64, %v1135
    %v1137 = vand.u32 %v1136, 4294901760
    %1138 = vmatpush.msra.mxu0 %v1137
    %v1139 = vand.u32 %v63, 4294901760
    %v1140 = vsub.f32 %v63, %v1139
    %v1141 = vand.u32 %v1140, 4294901760
    %1142 = vmatpush.msra.mxu0 %v1141
    %v1143 = vand.u32 %v62, 4294901760
    %v1144 = vsub.f32 %v62, %v1143
    %v1145 = vand.u32 %v1144, 4294901760
    %1146 = vmatpush.msra.mxu0 %v1145
    %v1147 = vand.u32 %v61, 4294901760
    %v1148 = vsub.f32 %v61, %v1147
    %v1149 = vand.u32 %v1148, 4294901760
    %1150 = vmatpush.msra.mxu0 %v1149
    %v1151 = vand.u32 %v60, 4294901760
    %v1152 = vsub.f32 %v60, %v1151
    %v1153 = vand.u32 %v1152, 4294901760
    %1154 = vmatpush.msra.mxu0 %v1153
    %v1155 = vand.u32 %v172, 4294901760
    %1156 = vmatmul.f32.gmra.mxu0 %v1155
    %v1157 = vpop.f32.mrf.mxu0
    %v1158 = vadd.f32 %v1089, %v1157
    %1159 = vdwg.mxu0
    %v1160 = vand.u32 %v75, 4294901760
    %1161 = vmatpush.msra.mxu0 %v1160
    %v1162 = vand.u32 %v74, 4294901760
    %1163 = vmatpush.msra.mxu0 %v1162
    %v1164 = vand.u32 %v73, 4294901760
    %1165 = vmatpush.msra.mxu0 %v1164
    %v1166 = vand.u32 %v72, 4294901760
    %1167 = vmatpush.msra.mxu0 %v1166
    %v1168 = vand.u32 %v71, 4294901760
    %1169 = vmatpush.msra.mxu0 %v1168
    %v1170 = vand.u32 %v70, 4294901760
    %1171 = vmatpush.msra.mxu0 %v1170
    %v1172 = vand.u32 %v69, 4294901760
    %1173 = vmatpush.msra.mxu0 %v1172
    %v1174 = vand.u32 %v68, 4294901760
    %1175 = vmatpush.msra.mxu0 %v1174
    %v1176 = vand.u32 %v67, 4294901760
    %1177 = vmatpush.msra.mxu0 %v1176
    %v1178 = vand.u32 %v66, 4294901760
    %1179 = vmatpush.msra.mxu0 %v1178
    %v1180 = vand.u32 %v65, 4294901760
    %1181 = vmatpush.msra.mxu0 %v1180
    %v1182 = vand.u32 %v64, 4294901760
    %1183 = vmatpush.msra.mxu0 %v1182
    %v1184 = vand.u32 %v63, 4294901760
    %1185 = vmatpush.msra.mxu0 %v1184
    %v1186 = vand.u32 %v62, 4294901760
    %1187 = vmatpush.msra.mxu0 %v1186
    %v1188 = vand.u32 %v61, 4294901760
    %1189 = vmatpush.msra.mxu0 %v1188
    %v1190 = vand.u32 %v60, 4294901760
    %1191 = vmatpush.msra.mxu0 %v1190
    %v1192 = vand.u32 %v172, 4294901760
    %1193 = vmatmul.f32.gmra.mxu0 %v1192
    %v1194 = vpop.f32.mrf.mxu0
    %v1195 = vadd.f32 %v1158, %v1194
    %1196 = vdwg.mxu0
    %v1197 = vand.u32 %v91, 4294901760
    %1198 = vmatpush.msra.mxu0 %v1197
    %v1199 = vand.u32 %v90, 4294901760
    %1200 = vmatpush.msra.mxu0 %v1199
    %v1201 = vand.u32 %v89, 4294901760
    %1202 = vmatpush.msra.mxu0 %v1201
    %v1203 = vand.u32 %v88, 4294901760
    %1204 = vmatpush.msra.mxu0 %v1203
    %v1205 = vand.u32 %v87, 4294901760
    %1206 = vmatpush.msra.mxu0 %v1205
    %v1207 = vand.u32 %v86, 4294901760
    %1208 = vmatpush.msra.mxu0 %v1207
    %v1209 = vand.u32 %v85, 4294901760
    %1210 = vmatpush.msra.mxu0 %v1209
    %v1211 = vand.u32 %v84, 4294901760
    %1212 = vmatpush.msra.mxu0 %v1211
    %v1213 = vand.u32 %v83, 4294901760
    %1214 = vmatpush.msra.mxu0 %v1213
    %v1215 = vand.u32 %v82, 4294901760
    %1216 = vmatpush.msra.mxu0 %v1215
    %v1217 = vand.u32 %v81, 4294901760
    %1218 = vmatpush.msra.mxu0 %v1217
    %v1219 = vand.u32 %v80, 4294901760
    %1220 = vmatpush.msra.mxu0 %v1219
    %v1221 = vand.u32 %v79, 4294901760
    %1222 = vmatpush.msra.mxu0 %v1221
    %v1223 = vand.u32 %v78, 4294901760
    %1224 = vmatpush.msra.mxu0 %v1223
    %v1225 = vand.u32 %v77, 4294901760
    %1226 = vmatpush.msra.mxu0 %v1225
    %v1227 = vand.u32 %v76, 4294901760
    %1228 = vmatpush.msra.mxu0 %v1227
    %v1229 = vand.u32 %v173, 4294901760
    %v1230 = vsub.f32 %v173, %v1229
    %v1231 = vand.u32 %v1230, 4294901760
    %v1232 = vsub.f32 %v1230, %v1231
    %v1233 = vand.u32 %v1232, 4294901760
    %1234 = vmatmul.f32.gmra.mxu0 %v1233
    %v1235 = vpop.f32.mrf.mxu0
    %v1236 = vadd.f32 %v1195, %v1235
    %1237 = vdwg.mxu0
    %v1238 = vand.u32 %v91, 4294901760
    %v1239 = vsub.f32 %v91, %v1238
    %v1240 = vand.u32 %v1239, 4294901760
    %v1241 = vsub.f32 %v1239, %v1240
    %v1242 = vand.u32 %v1241, 4294901760
    %1243 = vmatpush.msra.mxu0 %v1242
    %v1244 = vand.u32 %v90, 4294901760
    %v1245 = vsub.f32 %v90, %v1244
    %v1246 = vand.u32 %v1245, 4294901760
    %v1247 = vsub.f32 %v1245, %v1246
    %v1248 = vand.u32 %v1247, 4294901760
    %1249 = vmatpush.msra.mxu0 %v1248
    %v1250 = vand.u32 %v89, 4294901760
    %v1251 = vsub.f32 %v89, %v1250
    %v1252 = vand.u32 %v1251, 4294901760
    %v1253 = vsub.f32 %v1251, %v1252
    %v1254 = vand.u32 %v1253, 4294901760
    %1255 = vmatpush.msra.mxu0 %v1254
    %v1256 = vand.u32 %v88, 4294901760
    %v1257 = vsub.f32 %v88, %v1256
    %v1258 = vand.u32 %v1257, 4294901760
    %v1259 = vsub.f32 %v1257, %v1258
    %v1260 = vand.u32 %v1259, 4294901760
    %1261 = vmatpush.msra.mxu0 %v1260
    %v1262 = vand.u32 %v87, 4294901760
    %v1263 = vsub.f32 %v87, %v1262
    %v1264 = vand.u32 %v1263, 4294901760
    %v1265 = vsub.f32 %v1263, %v1264
    %v1266 = vand.u32 %v1265, 4294901760
    %1267 = vmatpush.msra.mxu0 %v1266
    %v1268 = vand.u32 %v86, 4294901760
    %v1269 = vsub.f32 %v86, %v1268
    %v1270 = vand.u32 %v1269, 4294901760
    %v1271 = vsub.f32 %v1269, %v1270
    %v1272 = vand.u32 %v1271, 4294901760
    %1273 = vmatpush.msra.mxu0 %v1272
    %v1274 = vand.u32 %v85, 4294901760
    %v1275 = vsub.f32 %v85, %v1274
    %v1276 = vand.u32 %v1275, 4294901760
    %v1277 = vsub.f32 %v1275, %v1276
    %v1278 = vand.u32 %v1277, 4294901760
    %1279 = vmatpush.msra.mxu0 %v1278
    %v1280 = vand.u32 %v84, 4294901760
    %v1281 = vsub.f32 %v84, %v1280
    %v1282 = vand.u32 %v1281, 4294901760
    %v1283 = vsub.f32 %v1281, %v1282
    %v1284 = vand.u32 %v1283, 4294901760
    %1285 = vmatpush.msra.mxu0 %v1284
    %v1286 = vand.u32 %v83, 4294901760
    %v1287 = vsub.f32 %v83, %v1286
    %v1288 = vand.u32 %v1287, 4294901760
    %v1289 = vsub.f32 %v1287, %v1288
    %v1290 = vand.u32 %v1289, 4294901760
    %1291 = vmatpush.msra.mxu0 %v1290
    %v1292 = vand.u32 %v82, 4294901760
    %v1293 = vsub.f32 %v82, %v1292
    %v1294 = vand.u32 %v1293, 4294901760
    %v1295 = vsub.f32 %v1293, %v1294
    %v1296 = vand.u32 %v1295, 4294901760
    %1297 = vmatpush.msra.mxu0 %v1296
    %v1298 = vand.u32 %v81, 4294901760
    %v1299 = vsub.f32 %v81, %v1298
    %v1300 = vand.u32 %v1299, 4294901760
    %v1301 = vsub.f32 %v1299, %v1300
    %v1302 = vand.u32 %v1301, 4294901760
    %1303 = vmatpush.msra.mxu0 %v1302
    %v1304 = vand.u32 %v80, 4294901760
    %v1305 = vsub.f32 %v80, %v1304
    %v1306 = vand.u32 %v1305, 4294901760
    %v1307 = vsub.f32 %v1305, %v1306
    %v1308 = vand.u32 %v1307, 4294901760
    %1309 = vmatpush.msra.mxu0 %v1308
    %v1310 = vand.u32 %v79, 4294901760
    %v1311 = vsub.f32 %v79, %v1310
    %v1312 = vand.u32 %v1311, 4294901760
    %v1313 = vsub.f32 %v1311, %v1312
    %v1314 = vand.u32 %v1313, 4294901760
    %1315 = vmatpush.msra.mxu0 %v1314
    %v1316 = vand.u32 %v78, 4294901760
    %v1317 = vsub.f32 %v78, %v1316
    %v1318 = vand.u32 %v1317, 4294901760
    %v1319 = vsub.f32 %v1317, %v1318
    %v1320 = vand.u32 %v1319, 4294901760
    %1321 = vmatpush.msra.mxu0 %v1320
    %v1322 = vand.u32 %v77, 4294901760
    %v1323 = vsub.f32 %v77, %v1322
    %v1324 = vand.u32 %v1323, 4294901760
    %v1325 = vsub.f32 %v1323, %v1324
    %v1326 = vand.u32 %v1325, 4294901760
    %1327 = vmatpush.msra.mxu0 %v1326
    %v1328 = vand.u32 %v76, 4294901760
    %v1329 = vsub.f32 %v76, %v1328
    %v1330 = vand.u32 %v1329, 4294901760
    %v1331 = vsub.f32 %v1329, %v1330
    %v1332 = vand.u32 %v1331, 4294901760
    %1333 = vmatpush.msra.mxu0 %v1332
    %v1334 = vand.u32 %v173, 4294901760
    %1335 = vmatmul.f32.gmra.mxu0 %v1334
    %v1336 = vpop.f32.mrf.mxu0
    %v1337 = vadd.f32 %v1236, %v1336
    %1338 = vdwg.mxu0
    %v1339 = vand.u32 %v91, 4294901760
    %v1340 = vsub.f32 %v91, %v1339
    %1341 = vmatpush.msra.mxu0 %v1340
    %v1342 = vand.u32 %v90, 4294901760
    %v1343 = vsub.f32 %v90, %v1342
    %1344 = vmatpush.msra.mxu0 %v1343
    %v1345 = vand.u32 %v89, 4294901760
    %v1346 = vsub.f32 %v89, %v1345
    %1347 = vmatpush.msra.mxu0 %v1346
    %v1348 = vand.u32 %v88, 4294901760
    %v1349 = vsub.f32 %v88, %v1348
    %1350 = vmatpush.msra.mxu0 %v1349
    %v1351 = vand.u32 %v87, 4294901760
    %v1352 = vsub.f32 %v87, %v1351
    %1353 = vmatpush.msra.mxu0 %v1352
    %v1354 = vand.u32 %v86, 4294901760
    %v1355 = vsub.f32 %v86, %v1354
    %1356 = vmatpush.msra.mxu0 %v1355
    %v1357 = vand.u32 %v85, 4294901760
    %v1358 = vsub.f32 %v85, %v1357
    %1359 = vmatpush.msra.mxu0 %v1358
    %v1360 = vand.u32 %v84, 4294901760
    %v1361 = vsub.f32 %v84, %v1360
    %1362 = vmatpush.msra.mxu0 %v1361
    %v1363 = vand.u32 %v83, 4294901760
    %v1364 = vsub.f32 %v83, %v1363
    %1365 = vmatpush.msra.mxu0 %v1364
    %v1366 = vand.u32 %v82, 4294901760
    %v1367 = vsub.f32 %v82, %v1366
    %1368 = vmatpush.msra.mxu0 %v1367
    %v1369 = vand.u32 %v81, 4294901760
    %v1370 = vsub.f32 %v81, %v1369
    %1371 = vmatpush.msra.mxu0 %v1370
    %v1372 = vand.u32 %v80, 4294901760
    %v1373 = vsub.f32 %v80, %v1372
    %1374 = vmatpush.msra.mxu0 %v1373
    %v1375 = vand.u32 %v79, 4294901760
    %v1376 = vsub.f32 %v79, %v1375
    %1377 = vmatpush.msra.mxu0 %v1376
    %v1378 = vand.u32 %v78, 4294901760
    %v1379 = vsub.f32 %v78, %v1378
    %1380 = vmatpush.msra.mxu0 %v1379
    %v1381 = vand.u32 %v77, 4294901760
    %v1382 = vsub.f32 %v77, %v1381
    %1383 = vmatpush.msra.mxu0 %v1382
    %v1384 = vand.u32 %v76, 4294901760
    %v1385 = vsub.f32 %v76, %v1384
    %1386 = vmatpush.msra.mxu0 %v1385
    %v1387 = vand.u32 %v173, 4294901760
    %v1388 = vsub.f32 %v173, %v1387
    %1389 = vmatmul.f32.gmra.mxu0 %v1388
    %v1390 = vpop.f32.mrf.mxu0
    %v1391 = vadd.f32 %v1337, %v1390
    %1392 = vdwg.mxu0
    %v1393 = vand.u32 %v91, 4294901760
    %1394 = vmatpush.msra.mxu0 %v1393
    %v1395 = vand.u32 %v90, 4294901760
    %1396 = vmatpush.msra.mxu0 %v1395
    %v1397 = vand.u32 %v89, 4294901760
    %1398 = vmatpush.msra.mxu0 %v1397
    %v1399 = vand.u32 %v88, 4294901760
    %1400 = vmatpush.msra.mxu0 %v1399
    %v1401 = vand.u32 %v87, 4294901760
    %1402 = vmatpush.msra.mxu0 %v1401
    %v1403 = vand.u32 %v86, 4294901760
    %1404 = vmatpush.msra.mxu0 %v1403
    %v1405 = vand.u32 %v85, 4294901760
    %1406 = vmatpush.msra.mxu0 %v1405
    %v1407 = vand.u32 %v84, 4294901760
    %1408 = vmatpush.msra.mxu0 %v1407
    %v1409 = vand.u32 %v83, 4294901760
    %1410 = vmatpush.msra.mxu0 %v1409
    %v1411 = vand.u32 %v82, 4294901760
    %1412 = vmatpush.msra.mxu0 %v1411
    %v1413 = vand.u32 %v81, 4294901760
    %1414 = vmatpush.msra.mxu0 %v1413
    %v1415 = vand.u32 %v80, 4294901760
    %1416 = vmatpush.msra.mxu0 %v1415
    %v1417 = vand.u32 %v79, 4294901760
    %1418 = vmatpush.msra.mxu0 %v1417
    %v1419 = vand.u32 %v78, 4294901760
    %1420 = vmatpush.msra.mxu0 %v1419
    %v1421 = vand.u32 %v77, 4294901760
    %1422 = vmatpush.msra.mxu0 %v1421
    %v1423 = vand.u32 %v76, 4294901760
    %1424 = vmatpush.msra.mxu0 %v1423
    %v1425 = vand.u32 %v173, 4294901760
    %v1426 = vsub.f32 %v173, %v1425
    %v1427 = vand.u32 %v1426, 4294901760
    %1428 = vmatmul.f32.gmra.mxu0 %v1427
    %v1429 = vpop.f32.mrf.mxu0
    %v1430 = vadd.f32 %v1391, %v1429
    %1431 = vdwg.mxu0
    %v1432 = vand.u32 %v91, 4294901760
    %v1433 = vsub.f32 %v91, %v1432
    %v1434 = vand.u32 %v1433, 4294901760
    %1435 = vmatpush.msra.mxu0 %v1434
    %v1436 = vand.u32 %v90, 4294901760
    %v1437 = vsub.f32 %v90, %v1436
    %v1438 = vand.u32 %v1437, 4294901760
    %1439 = vmatpush.msra.mxu0 %v1438
    %v1440 = vand.u32 %v89, 4294901760
    %v1441 = vsub.f32 %v89, %v1440
    %v1442 = vand.u32 %v1441, 4294901760
    %1443 = vmatpush.msra.mxu0 %v1442
    %v1444 = vand.u32 %v88, 4294901760
    %v1445 = vsub.f32 %v88, %v1444
    %v1446 = vand.u32 %v1445, 4294901760
    %1447 = vmatpush.msra.mxu0 %v1446
    %v1448 = vand.u32 %v87, 4294901760
    %v1449 = vsub.f32 %v87, %v1448
    %v1450 = vand.u32 %v1449, 4294901760
    %1451 = vmatpush.msra.mxu0 %v1450
    %v1452 = vand.u32 %v86, 4294901760
    %v1453 = vsub.f32 %v86, %v1452
    %v1454 = vand.u32 %v1453, 4294901760
    %1455 = vmatpush.msra.mxu0 %v1454
    %v1456 = vand.u32 %v85, 4294901760
    %v1457 = vsub.f32 %v85, %v1456
    %v1458 = vand.u32 %v1457, 4294901760
    %1459 = vmatpush.msra.mxu0 %v1458
    %v1460 = vand.u32 %v84, 4294901760
    %v1461 = vsub.f32 %v84, %v1460
    %v1462 = vand.u32 %v1461, 4294901760
    %1463 = vmatpush.msra.mxu0 %v1462
    %v1464 = vand.u32 %v83, 4294901760
    %v1465 = vsub.f32 %v83, %v1464
    %v1466 = vand.u32 %v1465, 4294901760
    %1467 = vmatpush.msra.mxu0 %v1466
    %v1468 = vand.u32 %v82, 4294901760
    %v1469 = vsub.f32 %v82, %v1468
    %v1470 = vand.u32 %v1469, 4294901760
    %1471 = vmatpush.msra.mxu0 %v1470
    %v1472 = vand.u32 %v81, 4294901760
    %v1473 = vsub.f32 %v81, %v1472
    %v1474 = vand.u32 %v1473, 4294901760
    %1475 = vmatpush.msra.mxu0 %v1474
    %v1476 = vand.u32 %v80, 4294901760
    %v1477 = vsub.f32 %v80, %v1476
    %v1478 = vand.u32 %v1477, 4294901760
    %1479 = vmatpush.msra.mxu0 %v1478
    %v1480 = vand.u32 %v79, 4294901760
    %v1481 = vsub.f32 %v79, %v1480
    %v1482 = vand.u32 %v1481, 4294901760
    %1483 = vmatpush.msra.mxu0 %v1482
    %v1484 = vand.u32 %v78, 4294901760
    %v1485 = vsub.f32 %v78, %v1484
    %v1486 = vand.u32 %v1485, 4294901760
    %1487 = vmatpush.msra.mxu0 %v1486
    %v1488 = vand.u32 %v77, 4294901760
    %v1489 = vsub.f32 %v77, %v1488
    %v1490 = vand.u32 %v1489, 4294901760
    %1491 = vmatpush.msra.mxu0 %v1490
    %v1492 = vand.u32 %v76, 4294901760
    %v1493 = vsub.f32 %v76, %v1492
    %v1494 = vand.u32 %v1493, 4294901760
    %1495 = vmatpush.msra.mxu0 %v1494
    %v1496 = vand.u32 %v173, 4294901760
    %1497 = vmatmul.f32.gmra.mxu0 %v1496
    %v1498 = vpop.f32.mrf.mxu0
    %v1499 = vadd.f32 %v1430, %v1498
    %1500 = vdwg.mxu0
    %v1501 = vand.u32 %v91, 4294901760
    %1502 = vmatpush.msra.mxu0 %v1501
    %v1503 = vand.u32 %v90, 4294901760
    %1504 = vmatpush.msra.mxu0 %v1503
    %v1505 = vand.u32 %v89, 4294901760
    %1506 = vmatpush.msra.mxu0 %v1505
    %v1507 = vand.u32 %v88, 4294901760
    %1508 = vmatpush.msra.mxu0 %v1507
    %v1509 = vand.u32 %v87, 4294901760
    %1510 = vmatpush.msra.mxu0 %v1509
    %v1511 = vand.u32 %v86, 4294901760
    %1512 = vmatpush.msra.mxu0 %v1511
    %v1513 = vand.u32 %v85, 4294901760
    %1514 = vmatpush.msra.mxu0 %v1513
    %v1515 = vand.u32 %v84, 4294901760
    %1516 = vmatpush.msra.mxu0 %v1515
    %v1517 = vand.u32 %v83, 4294901760
    %1518 = vmatpush.msra.mxu0 %v1517
    %v1519 = vand.u32 %v82, 4294901760
    %1520 = vmatpush.msra.mxu0 %v1519
    %v1521 = vand.u32 %v81, 4294901760
    %1522 = vmatpush.msra.mxu0 %v1521
    %v1523 = vand.u32 %v80, 4294901760
    %1524 = vmatpush.msra.mxu0 %v1523
    %v1525 = vand.u32 %v79, 4294901760
    %1526 = vmatpush.msra.mxu0 %v1525
    %v1527 = vand.u32 %v78, 4294901760
    %1528 = vmatpush.msra.mxu0 %v1527
    %v1529 = vand.u32 %v77, 4294901760
    %1530 = vmatpush.msra.mxu0 %v1529
    %v1531 = vand.u32 %v76, 4294901760
    %1532 = vmatpush.msra.mxu0 %v1531
    %v1533 = vand.u32 %v173, 4294901760
    %1534 = vmatmul.f32.gmra.mxu0 %v1533
    %v1535 = vpop.f32.mrf.mxu0
    %v1536 = vadd.f32 %v1499, %v1535
    %1537 = vdwg.mxu0
    %1538 = vst [vmem:[#allocation5] sm:$0xff] %v1536
    // Predicated region
    $region14: #{tpu_custom_call.1} parent=1 // pred_check
      _
    $region15: #{tpu_custom_call.1} parent=1 // pred_check_branch
      %1540 = sbr.rel (0) target = $region17
    $region16: #{tpu_custom_call.1} parent=1 // pred_region
      %1542 = vsyncadd [#allocation4], 0
      %s1544 = sshll.u32 [#allocation5], 4
      %s1545 = int_to_ptr.vmem [resolvable:$true] %s1544
      %s1546 = sshll.u32 %s2, 4
      %s1547 = int_to_ptr.hbm [resolvable:$true] %s1546
      %1549 = dma.vmem_to_hbm [thread:$0]  %s1545, 128, %s1547, [#allocation4]
    $region17: #{tpu_custom_call.1} parent=1 // pred_fallthru
      _
    // Predicated region
    $region18: #{tpu_custom_call.1} parent=1 // pred_check
      _
    $region19: #{tpu_custom_call.1} parent=1 // pred_check_branch
      %1551 = sbr.rel (0) target = $region21
    $region20: #{tpu_custom_call.1} parent=1 // pred_region
      %1553 = dma.done [#allocation4], 128
    $region21: #{tpu_custom_call.1} parent=1 // pred_fallthru
      _
    %1554 = vsyncpa [#allocation3], 1
    %1555 = vsyncpa [#allocation4], 1

</llo_original>
